<compile_context>
chip_gen: v7x
topology: tpu7x:2x2x1
jax: 0.10.0
libtpu: 0.0.40
codegen_flags: <defaults>
</compile_context>

<pallas_src>
import functools

import jax
import jax.numpy as jnp
from jax.experimental import pallas as pl
from jax.experimental.pallas import tpu as pltpu

DEFAULT_W0 = 20.0
LANE = 512              # lane-dense last dim (multiple of 128 -> unmasked vector stores)


def _first_finer_kernel(x_ref, o_ref, *, w0):
    x = x_ref[...]                               # (block_rows, LANE) f32, VPU-resident
    scale = jnp.abs(x) + 1.0                     # VPU (cheap bit-op + add)
    o_ref[...] = jnp.sin(w0 * scale * x)         # sin on the transcendental path


def first_finer_forward(x, w0=DEFAULT_W0, block_rows=1024, lane=LANE):
    """sin(w0 * (|x|+1) * x), elementwise, for any input shape."""
    orig_shape = x.shape
    orig_dtype = x.dtype
    flat = x.reshape(-1).astype(jnp.float32)
    n = flat.shape[0]

    rows = max(int(pl.cdiv(n, lane)), 1)
    # Block rows: as large as requested, a multiple of 8 (sublane), no larger than needed.
    br = int(min(block_rows, int(pl.cdiv(rows, 8)) * 8))
    br = max(8, (br // 8) * 8)
    rows_pad = int(pl.cdiv(rows, br)) * br
    n_pad = rows_pad * lane

    flat = jnp.pad(flat, (0, n_pad - n))
    x2d = flat.reshape(rows_pad, lane)

    out2d = pl.pallas_call(
        functools.partial(_first_finer_kernel, w0=float(w0)),
        out_shape=jax.ShapeDtypeStruct((rows_pad, lane), jnp.float32),
        grid_spec=pltpu.PrefetchScalarGridSpec(
            num_scalar_prefetch=0,
            grid=(rows_pad // br,),
            in_specs=[pl.BlockSpec((br, lane), lambda i: (i, 0))],
            out_specs=pl.BlockSpec((br, lane), lambda i: (i, 0)),
        ),
        compiler_params=pltpu.CompilerParams(
            dimension_semantics=("parallel",),      # megacore sharding on v7x
            vmem_limit_bytes=64 * 1024 * 1024,      # explicit headroom (v5e default is 16 MiB)
        ),
        cost_estimate=pl.CostEstimate(
            flops=4 * n_pad,                        # abs, +1, two multiplies per element
            transcendentals=n_pad,                  # one sin per element
            bytes_accessed=8 * n_pad,               # 4 B read + 4 B write per element
        ),
    )(x2d)

    out = out2d.reshape(-1)[:n].reshape(orig_shape)
    return out.astype(orig_dtype)


def reference_forward(x, w0=DEFAULT_W0):
    """Pure-JAX reference (same math, no Pallas) for a correctness check."""
    xf = x.astype(jnp.float32)
    return jnp.sin(w0 * (jnp.abs(xf) + 1.0) * xf).astype(x.dtype)


if __name__ == "__main__":
    key = jax.random.PRNGKey(0)
    # Small input consistent with where FirstFiner sits in the module family
    # (first-layer pre-activations of a coordinate net): batch=2, 256 samples, 32 features.
    x = jax.random.uniform(key, (2, 256, 32), jnp.float32, minval=-1.0, maxval=1.0)

    out_big = first_finer_forward(x)                     # single large lane-dense block
    out_tiled = first_finer_forward(x, block_rows=8)     # multi-step pipelined grid path
    jax.block_until_ready((out_big, out_tiled))

    ref = reference_forward(x)
    assert out_big.shape == x.shape, out_big.shape
    assert jnp.allclose(out_big, ref, atol=1e-4, rtol=1e-4), \
        float(jnp.max(jnp.abs(out_big - ref)))
    assert jnp.allclose(out_tiled, ref, atol=1e-4, rtol=1e-4), \
        float(jnp.max(jnp.abs(out_tiled - ref)))

    print("KERNEL_OK")
</pallas_src>

<mosaic_0001>
module attributes {stable_mosaic.version = 11 : i64} {
  func.func @_first_finer_kernel(%arg0: i32, %arg1: memref<32x512xf32, #tpu.memory_space<vmem>>, %arg2: memref<32x512xf32, #tpu.memory_space<vmem>>) attributes {dimension_semantics = [#tpu.dimension_semantics<parallel>], iteration_bounds = array<i64: 1>, scalar_prefetch = 0 : i64, scratch_operands = 0 : i64, tpu.core_type = #tpu.core_type<tc>, window_params = [{transform_indices = @transform_0, window_bounds = array<i64: 32, 512>}, {transform_indices = @transform_1, window_bounds = array<i64: 32, 512>}]} {
    %c0 = arith.constant 0 : index
    %c0_0 = arith.constant 0 : index
    %0 = vector.load %arg1[%c0, %c0_0] : memref<32x512xf32, #tpu.memory_space<vmem>>, vector<32x512xf32>
    %1 = math.absf %0 : vector<32x512xf32>
    %cst = arith.constant 1.000000e+00 : f32
    %2 = vector.broadcast %cst : f32 to vector<32x512xf32>
    %3 = arith.addf %1, %2 : vector<32x512xf32>
    %cst_1 = arith.constant 2.000000e+01 : f32
    %4 = vector.broadcast %cst_1 : f32 to vector<32x512xf32>
    %5 = arith.mulf %4, %3 : vector<32x512xf32>
    %6 = arith.mulf %5, %0 : vector<32x512xf32>
    %7 = math.sin %6 : vector<32x512xf32>
    %c0_2 = arith.constant 0 : index
    %c0_3 = arith.constant 0 : index
    %8 = vector.load %arg2[%c0_2, %c0_3] : memref<32x512xf32, #tpu.memory_space<vmem>>, vector<32x512xf32>
    tpu.vector_store %arg2[%c0_2, %c0_3], %7 {strides = array<i32>} : memref<32x512xf32, #tpu.memory_space<vmem>>, vector<32x512xf32>,
    return
  }
  func.func @transform_0(%arg0: i32) -> (i32, i32) {
    %c0_i32 = arith.constant 0 : i32
    %c0_i32_0 = arith.constant 0 : i32
    return %arg0, %c0_i32 : i32, i32
  }
  func.func @transform_1(%arg0: i32) -> (i32, i32) {
    %c0_i32 = arith.constant 0 : i32
    %c0_i32_0 = arith.constant 0 : i32
    return %arg0, %c0_i32 : i32, i32
  }
}

</mosaic_0001>

<llo_original>
// kernel: tpu_custom_call.1
$region0: #{tpu_custom_call.1}
  #allocation0 [shape = 'u32[]', space=smem, size = 0x4, offset = 0x4, fixed_abs, tag = 'smem constant byte address 0x4 - core index']
  #allocation1 [shape = 'u32[144,128]{1,0:T(1,128)}', space=vmem, size = 0x12000, scoped, tag = 'internal scratch']
  %s0 = inlined_call_operand.hbm [shape: f32[32,512], index: 0, kind: input, shape index: {}]
  %s1 = inlined_call_operand.hbm [shape: f32[32,512], index: 1, kind: output, shape index: {}]
  %s2 = sld [smem:[#allocation0]]
  $region18: #{tpu_custom_call.1} parent=0
    _
  %s4 = ssub.s32 1, %s2
  %s5 = scalar_select 0, %s4, %s2
  $region1: #{tpu_custom_call.1} parent=0
    #allocation2 [shape = 'u8[65536]{0}', space=vmem, size = 0x10000, scoped, tag = 'input window, operand 0, single buffered']
    #allocation3 [shape = 's32[1]{0}', space=sflag, size = 0x4, scoped, tag = 'scoped memory for tpu_custom_call.1']
    #allocation4 [shape = 's32[1]{0}', space=sflag, size = 0x4, scoped, tag = 'scoped memory for tpu_custom_call.1']
    #allocation5 [shape = 'u8[65536]{0}', space=vmem, size = 0x10000, scoped, tag = 'output window, operand 0, single buffered']
    %6 = vsyncpa [#allocation3], 0
    %7 = vsyncpa [#allocation4], 0
    // Predicated region
    $region2: #{tpu_custom_call.1} parent=1 // pred_check
      _
    $region3: #{tpu_custom_call.1} parent=1 // pred_check_branch
      %9 = sbr.rel (0) target = $region5
    $region4: #{tpu_custom_call.1} parent=1 // pred_region
      %s11 = ssub.s32 2048, 2048
      %12 = vsyncadd [#allocation3], %s11
      %s13 = sshll.u32 [#allocation2], 4
      %s14 = int_to_ptr.vmem [resolvable:$true] %s13
      %19 = dma.hbm_to_vmem [thread:$0]  %s0, 2048, %s14, [#allocation3], 512, 512, 32
    $region5: #{tpu_custom_call.1} parent=1 // pred_fallthru
      _
    // Predicated region
    $region6: #{tpu_custom_call.1} parent=1 // pred_check
      _
    $region7: #{tpu_custom_call.1} parent=1 // pred_check_branch
      %21 = sbr.rel (0) target = $region9
    $region8: #{tpu_custom_call.1} parent=1 // pred_region
      %22 = dma.done [#allocation3], 2048
    $region9: #{tpu_custom_call.1} parent=1 // pred_fallthru
      _
    %v23 = vld [vmem:[#allocation2] sm:$0xff]
    %v24 = vld [vmem:[#allocation2 + $0x8] sm:$0xff]
    %v25 = vld [vmem:[#allocation2 + $0x10] sm:$0xff]
    %v26 = vld [vmem:[#allocation2 + $0x18] sm:$0xff]
    %v27 = vld [vmem:[#allocation2 + $0x20] sm:$0xff]
    %v28 = vld [vmem:[#allocation2 + $0x28] sm:$0xff]
    %v29 = vld [vmem:[#allocation2 + $0x30] sm:$0xff]
    %v30 = vld [vmem:[#allocation2 + $0x38] sm:$0xff]
    %v31 = vld [vmem:[#allocation2 + $0x40] sm:$0xff]
    %v32 = vld [vmem:[#allocation2 + $0x48] sm:$0xff]
    %v33 = vld [vmem:[#allocation2 + $0x50] sm:$0xff]
    %v34 = vld [vmem:[#allocation2 + $0x58] sm:$0xff]
    %v35 = vld [vmem:[#allocation2 + $0x60] sm:$0xff]
    %v36 = vld [vmem:[#allocation2 + $0x68] sm:$0xff]
    %v37 = vld [vmem:[#allocation2 + $0x70] sm:$0xff]
    %v38 = vld [vmem:[#allocation2 + $0x78] sm:$0xff]
    %v39 = vand.u32 2147483647, %v23
    %v40 = vand.u32 2147483647, %v24
    %v41 = vand.u32 2147483647, %v25
    %v42 = vand.u32 2147483647, %v26
    %v43 = vand.u32 2147483647, %v27
    %v44 = vand.u32 2147483647, %v28
    %v45 = vand.u32 2147483647, %v29
    %v46 = vand.u32 2147483647, %v30
    %v47 = vand.u32 2147483647, %v31
    %v48 = vand.u32 2147483647, %v32
    %v49 = vand.u32 2147483647, %v33
    %v50 = vand.u32 2147483647, %v34
    %v51 = vand.u32 2147483647, %v35
    %v52 = vand.u32 2147483647, %v36
    %v53 = vand.u32 2147483647, %v37
    %v54 = vand.u32 2147483647, %v38
    %v55 = vadd.f32 %v39, 1.0
    %v56 = vadd.f32 %v40, 1.0
    %v57 = vadd.f32 %v41, 1.0
    %v58 = vadd.f32 %v42, 1.0
    %v59 = vadd.f32 %v43, 1.0
    %v60 = vadd.f32 %v44, 1.0
    %v61 = vadd.f32 %v45, 1.0
    %v62 = vadd.f32 %v46, 1.0
    %v63 = vadd.f32 %v47, 1.0
    %v64 = vadd.f32 %v48, 1.0
    %v65 = vadd.f32 %v49, 1.0
    %v66 = vadd.f32 %v50, 1.0
    %v67 = vadd.f32 %v51, 1.0
    %v68 = vadd.f32 %v52, 1.0
    %v69 = vadd.f32 %v53, 1.0
    %v70 = vadd.f32 %v54, 1.0
    %v71 = vmul.f32 %v55, 20.0
    %v72 = vmul.f32 %v56, 20.0
    %v73 = vmul.f32 %v57, 20.0
    %v74 = vmul.f32 %v58, 20.0
    %v75 = vmul.f32 %v59, 20.0
    %v76 = vmul.f32 %v60, 20.0
    %v77 = vmul.f32 %v61, 20.0
    %v78 = vmul.f32 %v62, 20.0
    %v79 = vmul.f32 %v63, 20.0
    %v80 = vmul.f32 %v64, 20.0
    %v81 = vmul.f32 %v65, 20.0
    %v82 = vmul.f32 %v66, 20.0
    %v83 = vmul.f32 %v67, 20.0
    %v84 = vmul.f32 %v68, 20.0
    %v85 = vmul.f32 %v69, 20.0
    %v86 = vmul.f32 %v70, 20.0
    %v87 = vmul.f32 %v71, %v23
    %v88 = vmul.f32 %v72, %v24
    %v89 = vmul.f32 %v73, %v25
    %v90 = vmul.f32 %v74, %v26
    %v91 = vmul.f32 %v75, %v27
    %v92 = vmul.f32 %v76, %v28
    %v93 = vmul.f32 %v77, %v29
    %v94 = vmul.f32 %v78, %v30
    %v95 = vmul.f32 %v79, %v31
    %v96 = vmul.f32 %v80, %v32
    %v97 = vmul.f32 %v81, %v33
    %v98 = vmul.f32 %v82, %v34
    %v99 = vmul.f32 %v83, %v35
    %v100 = vmul.f32 %v84, %v36
    %v101 = vmul.f32 %v85, %v37
    %v102 = vmul.f32 %v86, %v38
    %v103 = vand.u32 2147483647, %v87
    %vm104 = vcmp.le.f32.partialorder %v103, 0.7853982
    %vm105 = vcmp.lt.s32.totalorder %v87, 0
    %v106 = vand.u32 %v87, 2139095040
    %v107 = vshrl.u32 %v106, 23
    %v108 = vsub.s32 %v107, 127
    %v109 = vand.u32 2147483647, %v87
    %v110 = vand.u32 %v109, 8388607
    %v111 = vor.u32 %v110, 8388608
    %v112 = vsub.s32 0, %v111
    %v113 = vadd.s32 %v108, 1
    %vm114 = vcmp.gt.s32.totalorder %v113, 0
    %v115 = vsel %vm114, %v113, 0
    %v116 = vshrl.u32 %v115, 5
    %v117 = vand.u32 %v115, 31
    %v118 = vsub.s32 32, %v117
    %v119 = vshrl.u32 683565275, %v118
    %v120 = vshll.u32 683565275, %v117
    %v121 = vshrl.u32 2475754826, %v118
    %v122 = vor.u32 %v120, %v121
    %v123 = vshll.u32 2475754826, %v117
    %v124 = vshrl.u32 2131351028, %v118
    %v125 = vor.u32 %v123, %v124
    %v126 = vshll.u32 2131351028, %v117
    %v127 = vshrl.u32 2102212464, %v118
    %v128 = vor.u32 %v126, %v127
    %v129 = vshll.u32 2102212464, %v117
    %v130 = vshrl.u32 920167782, %v118
    %v131 = vor.u32 %v129, %v130
    %v132 = vshll.u32 920167782, %v117
    %v133 = vshrl.u32 1326507024, %v118
    %v134 = vor.u32 %v132, %v133
    %vm135 = vcmp.lt.s32.totalorder %v116, 1
    %vm136 = vcmp.lt.s32.totalorder %v116, 2
    %vm137 = vcmp.lt.s32.totalorder %v116, 3
    %vm138 = vcmp.lt.s32.totalorder %v116, 4
    %v139 = vsel %vm135, %v119, %v122
    %v140 = vsel %vm138, %v128, 2102212464
    %v141 = vsel %vm137, %v125, %v140
    %v142 = vsel %vm136, %v139, %v141
    %v143 = vsel %vm135, %v122, %v125
    %v144 = vsel %vm138, %v131, 920167782
    %v145 = vsel %vm137, %v128, %v144
    %v146 = vsel %vm136, %v143, %v145
    %v147 = vsel %vm135, %v125, %v128
    %v148 = vsel %vm138, %v134, 1326507024
    %v149 = vsel %vm137, %v131, %v148
    %v150 = vsel %vm136, %v147, %v149
    %v151 = vshll.u32 %v111, 8
    %v152 = vmul.u32.u64.compose %v151, %v150
    %v153 = vextract.low.u32 %v152
    %v154 = vextract.high.u32 %v152
    %v155 = vmul.u32.u64.compose %v151, %v146
    %v156 = vextract.low.u32 %v155
    %v157 = vextract.high.u32 %v155
    %v158 = vmul.u32 %v151, %v142
    %v159 = vadd.s32 %v154, %v156
    %vm160 = vc.u32 %v154, %v156
    %v161 = vadd.s32 %v157, 1
    %v162 = vsel %vm160, %v161, %v157
    %v163 = vadd.s32 %v158, %v162
    %v164 = vadd.s32 %v163, 536870912
    %v165 = vshrl.u32 %v164, 30
    %v166 = vshll.u32 %v165, 30
    %v167 = vsub.s32 %v163, %v166
    %vm168 = vcmp.lt.s32.totalorder %v167, 0
    %v169 = vsub.s32 0, %v167
    %v170 = vsel %vm168, %v169, %v167
    %v171 = vclz %v170
    %v172 = vsub.s32 %v171, 2
    %vm173 = vcmp.gt.s32.totalorder 0, %v172
    %v174 = vsel %vm173, 0, %v172
    %v175 = vsub.s32 32, %v174
    %v176 = vshll.u32 %v167, %v174
    %v177 = vshrl.u32 %v159, %v175
    %v178 = vor.u32 %v176, %v177
    %v179 = vsub.s32 4294967266, %v174
    %v180 = vadd.s32 %v179, 127
    %v181 = vshll.u32 %v180, 23
    %v182 = vor.u32 4788187, %v181
    %v183 = vand.u32 2147483647, %v182
    %v185 = vcvt.s32.f32 %v178
    %v186 = vmul.f32 %v185, %v183
    %v187 = vxor.u32 %v186, 2147483648
    %v188 = vsel %vm105, %v187, %v186
    %v189 = vsub.s32 4, %v165
    %v190 = vsel %vm105, %v189, %v165
    %v191 = vsel %vm104, %v87, %v188
    %v192 = vsel %vm104, 0, %v190
    %v193 = vcosq.f32.pop %v191
    %v194 = vsinq.f32.pop %v191
    %vm195 = vweird.f32 %v87
    %v196 = vadd.s32 %v192, 3
    %v197 = vand.u32 %v196, 3
    %vm198 = vcmp.lt.s32.totalorder %v197, 2
    %vm199 = vcmp.eq.s32.totalorder %v197, 0
    %v200 = vxor.u32 %v194, 2147483648
    %v201 = vsel %vm199, %v193, %v200
    %vm202 = vcmp.eq.s32.totalorder %v197, 2
    %v203 = vxor.u32 %v193, 2147483648
    %v204 = vsel %vm202, %v203, %v194
    %v205 = vsel %vm198, %v201, %v204
    %v206 = vsel %vm195, nan, %v205
    %v207 = vand.u32 2147483647, %v88
    %vm208 = vcmp.le.f32.partialorder %v207, 0.7853982
    %vm209 = vcmp.lt.s32.totalorder %v88, 0
    %v210 = vand.u32 %v88, 2139095040
    %v211 = vshrl.u32 %v210, 23
    %v212 = vsub.s32 %v211, 127
    %v213 = vand.u32 2147483647, %v88
    %v214 = vand.u32 %v213, 8388607
    %v215 = vor.u32 %v214, 8388608
    %v216 = vsub.s32 0, %v215
    %v217 = vadd.s32 %v212, 1
    %vm218 = vcmp.gt.s32.totalorder %v217, 0
    %v219 = vsel %vm218, %v217, 0
    %v220 = vshrl.u32 %v219, 5
    %v221 = vand.u32 %v219, 31
    %v222 = vsub.s32 32, %v221
    %v223 = vshrl.u32 683565275, %v222
    %v224 = vshll.u32 683565275, %v221
    %v225 = vshrl.u32 2475754826, %v222
    %v226 = vor.u32 %v224, %v225
    %v227 = vshll.u32 2475754826, %v221
    %v228 = vshrl.u32 2131351028, %v222
    %v229 = vor.u32 %v227, %v228
    %v230 = vshll.u32 2131351028, %v221
    %v231 = vshrl.u32 2102212464, %v222
    %v232 = vor.u32 %v230, %v231
    %v233 = vshll.u32 2102212464, %v221
    %v234 = vshrl.u32 920167782, %v222
    %v235 = vor.u32 %v233, %v234
    %v236 = vshll.u32 920167782, %v221
    %v237 = vshrl.u32 1326507024, %v222
    %v238 = vor.u32 %v236, %v237
    %vm239 = vcmp.lt.s32.totalorder %v220, 1
    %vm240 = vcmp.lt.s32.totalorder %v220, 2
    %vm241 = vcmp.lt.s32.totalorder %v220, 3
    %vm242 = vcmp.lt.s32.totalorder %v220, 4
    %v243 = vsel %vm239, %v223, %v226
    %v244 = vsel %vm242, %v232, 2102212464
    %v245 = vsel %vm241, %v229, %v244
    %v246 = vsel %vm240, %v243, %v245
    %v247 = vsel %vm239, %v226, %v229
    %v248 = vsel %vm242, %v235, 920167782
    %v249 = vsel %vm241, %v232, %v248
    %v250 = vsel %vm240, %v247, %v249
    %v251 = vsel %vm239, %v229, %v232
    %v252 = vsel %vm242, %v238, 1326507024
    %v253 = vsel %vm241, %v235, %v252
    %v254 = vsel %vm240, %v251, %v253
    %v255 = vshll.u32 %v215, 8
    %v256 = vmul.u32.u64.compose %v255, %v254
    %v257 = vextract.low.u32 %v256
    %v258 = vextract.high.u32 %v256
    %v259 = vmul.u32.u64.compose %v255, %v250
    %v260 = vextract.low.u32 %v259
    %v261 = vextract.high.u32 %v259
    %v262 = vmul.u32 %v255, %v246
    %v263 = vadd.s32 %v258, %v260
    %vm264 = vc.u32 %v258, %v260
    %v265 = vadd.s32 %v261, 1
    %v266 = vsel %vm264, %v265, %v261
    %v267 = vadd.s32 %v262, %v266
    %v268 = vadd.s32 %v267, 536870912
    %v269 = vshrl.u32 %v268, 30
    %v270 = vshll.u32 %v269, 30
    %v271 = vsub.s32 %v267, %v270
    %vm272 = vcmp.lt.s32.totalorder %v271, 0
    %v273 = vsub.s32 0, %v271
    %v274 = vsel %vm272, %v273, %v271
    %v275 = vclz %v274
    %v276 = vsub.s32 %v275, 2
    %vm277 = vcmp.gt.s32.totalorder 0, %v276
    %v278 = vsel %vm277, 0, %v276
    %v279 = vsub.s32 32, %v278
    %v280 = vshll.u32 %v271, %v278
    %v281 = vshrl.u32 %v263, %v279
    %v282 = vor.u32 %v280, %v281
    %v283 = vsub.s32 4294967266, %v278
    %v284 = vadd.s32 %v283, 127
    %v285 = vshll.u32 %v284, 23
    %v286 = vor.u32 4788187, %v285
    %v287 = vand.u32 2147483647, %v286
    %v289 = vcvt.s32.f32 %v282
    %v290 = vmul.f32 %v289, %v287
    %v291 = vxor.u32 %v290, 2147483648
    %v292 = vsel %vm209, %v291, %v290
    %v293 = vsub.s32 4, %v269
    %v294 = vsel %vm209, %v293, %v269
    %v295 = vsel %vm208, %v88, %v292
    %v296 = vsel %vm208, 0, %v294
    %v297 = vcosq.f32.pop %v295
    %v298 = vsinq.f32.pop %v295
    %vm299 = vweird.f32 %v88
    %v300 = vadd.s32 %v296, 3
    %v301 = vand.u32 %v300, 3
    %vm302 = vcmp.lt.s32.totalorder %v301, 2
    %vm303 = vcmp.eq.s32.totalorder %v301, 0
    %v304 = vxor.u32 %v298, 2147483648
    %v305 = vsel %vm303, %v297, %v304
    %vm306 = vcmp.eq.s32.totalorder %v301, 2
    %v307 = vxor.u32 %v297, 2147483648
    %v308 = vsel %vm306, %v307, %v298
    %v309 = vsel %vm302, %v305, %v308
    %v310 = vsel %vm299, nan, %v309
    %v311 = vand.u32 2147483647, %v89
    %vm312 = vcmp.le.f32.partialorder %v311, 0.7853982
    %vm313 = vcmp.lt.s32.totalorder %v89, 0
    %v314 = vand.u32 %v89, 2139095040
    %v315 = vshrl.u32 %v314, 23
    %v316 = vsub.s32 %v315, 127
    %v317 = vand.u32 2147483647, %v89
    %v318 = vand.u32 %v317, 8388607
    %v319 = vor.u32 %v318, 8388608
    %v320 = vsub.s32 0, %v319
    %v321 = vadd.s32 %v316, 1
    %vm322 = vcmp.gt.s32.totalorder %v321, 0
    %v323 = vsel %vm322, %v321, 0
    %v324 = vshrl.u32 %v323, 5
    %v325 = vand.u32 %v323, 31
    %v326 = vsub.s32 32, %v325
    %v327 = vshrl.u32 683565275, %v326
    %v328 = vshll.u32 683565275, %v325
    %v329 = vshrl.u32 2475754826, %v326
    %v330 = vor.u32 %v328, %v329
    %v331 = vshll.u32 2475754826, %v325
    %v332 = vshrl.u32 2131351028, %v326
    %v333 = vor.u32 %v331, %v332
    %v334 = vshll.u32 2131351028, %v325
    %v335 = vshrl.u32 2102212464, %v326
    %v336 = vor.u32 %v334, %v335
    %v337 = vshll.u32 2102212464, %v325
    %v338 = vshrl.u32 920167782, %v326
    %v339 = vor.u32 %v337, %v338
    %v340 = vshll.u32 920167782, %v325
    %v341 = vshrl.u32 1326507024, %v326
    %v342 = vor.u32 %v340, %v341
    %vm343 = vcmp.lt.s32.totalorder %v324, 1
    %vm344 = vcmp.lt.s32.totalorder %v324, 2
    %vm345 = vcmp.lt.s32.totalorder %v324, 3
    %vm346 = vcmp.lt.s32.totalorder %v324, 4
    %v347 = vsel %vm343, %v327, %v330
    %v348 = vsel %vm346, %v336, 2102212464
    %v349 = vsel %vm345, %v333, %v348
    %v350 = vsel %vm344, %v347, %v349
    %v351 = vsel %vm343, %v330, %v333
    %v352 = vsel %vm346, %v339, 920167782
    %v353 = vsel %vm345, %v336, %v352
    %v354 = vsel %vm344, %v351, %v353
    %v355 = vsel %vm343, %v333, %v336
    %v356 = vsel %vm346, %v342, 1326507024
    %v357 = vsel %vm345, %v339, %v356
    %v358 = vsel %vm344, %v355, %v357
    %v359 = vshll.u32 %v319, 8
    %v360 = vmul.u32.u64.compose %v359, %v358
    %v361 = vextract.low.u32 %v360
    %v362 = vextract.high.u32 %v360
    %v363 = vmul.u32.u64.compose %v359, %v354
    %v364 = vextract.low.u32 %v363
    %v365 = vextract.high.u32 %v363
    %v366 = vmul.u32 %v359, %v350
    %v367 = vadd.s32 %v362, %v364
    %vm368 = vc.u32 %v362, %v364
    %v369 = vadd.s32 %v365, 1
    %v370 = vsel %vm368, %v369, %v365
    %v371 = vadd.s32 %v366, %v370
    %v372 = vadd.s32 %v371, 536870912
    %v373 = vshrl.u32 %v372, 30
    %v374 = vshll.u32 %v373, 30
    %v375 = vsub.s32 %v371, %v374
    %vm376 = vcmp.lt.s32.totalorder %v375, 0
    %v377 = vsub.s32 0, %v375
    %v378 = vsel %vm376, %v377, %v375
    %v379 = vclz %v378
    %v380 = vsub.s32 %v379, 2
    %vm381 = vcmp.gt.s32.totalorder 0, %v380
    %v382 = vsel %vm381, 0, %v380
    %v383 = vsub.s32 32, %v382
    %v384 = vshll.u32 %v375, %v382
    %v385 = vshrl.u32 %v367, %v383
    %v386 = vor.u32 %v384, %v385
    %v387 = vsub.s32 4294967266, %v382
    %v388 = vadd.s32 %v387, 127
    %v389 = vshll.u32 %v388, 23
    %v390 = vor.u32 4788187, %v389
    %v391 = vand.u32 2147483647, %v390
    %v393 = vcvt.s32.f32 %v386
    %v394 = vmul.f32 %v393, %v391
    %v395 = vxor.u32 %v394, 2147483648
    %v396 = vsel %vm313, %v395, %v394
    %v397 = vsub.s32 4, %v373
    %v398 = vsel %vm313, %v397, %v373
    %v399 = vsel %vm312, %v89, %v396
    %v400 = vsel %vm312, 0, %v398
    %v401 = vcosq.f32.pop %v399
    %v402 = vsinq.f32.pop %v399
    %vm403 = vweird.f32 %v89
    %v404 = vadd.s32 %v400, 3
    %v405 = vand.u32 %v404, 3
    %vm406 = vcmp.lt.s32.totalorder %v405, 2
    %vm407 = vcmp.eq.s32.totalorder %v405, 0
    %v408 = vxor.u32 %v402, 2147483648
    %v409 = vsel %vm407, %v401, %v408
    %vm410 = vcmp.eq.s32.totalorder %v405, 2
    %v411 = vxor.u32 %v401, 2147483648
    %v412 = vsel %vm410, %v411, %v402
    %v413 = vsel %vm406, %v409, %v412
    %v414 = vsel %vm403, nan, %v413
    %v415 = vand.u32 2147483647, %v90
    %vm416 = vcmp.le.f32.partialorder %v415, 0.7853982
    %vm417 = vcmp.lt.s32.totalorder %v90, 0
    %v418 = vand.u32 %v90, 2139095040
    %v419 = vshrl.u32 %v418, 23
    %v420 = vsub.s32 %v419, 127
    %v421 = vand.u32 2147483647, %v90
    %v422 = vand.u32 %v421, 8388607
    %v423 = vor.u32 %v422, 8388608
    %v424 = vsub.s32 0, %v423
    %v425 = vadd.s32 %v420, 1
    %vm426 = vcmp.gt.s32.totalorder %v425, 0
    %v427 = vsel %vm426, %v425, 0
    %v428 = vshrl.u32 %v427, 5
    %v429 = vand.u32 %v427, 31
    %v430 = vsub.s32 32, %v429
    %v431 = vshrl.u32 683565275, %v430
    %v432 = vshll.u32 683565275, %v429
    %v433 = vshrl.u32 2475754826, %v430
    %v434 = vor.u32 %v432, %v433
    %v435 = vshll.u32 2475754826, %v429
    %v436 = vshrl.u32 2131351028, %v430
    %v437 = vor.u32 %v435, %v436
    %v438 = vshll.u32 2131351028, %v429
    %v439 = vshrl.u32 2102212464, %v430
    %v440 = vor.u32 %v438, %v439
    %v441 = vshll.u32 2102212464, %v429
    %v442 = vshrl.u32 920167782, %v430
    %v443 = vor.u32 %v441, %v442
    %v444 = vshll.u32 920167782, %v429
    %v445 = vshrl.u32 1326507024, %v430
    %v446 = vor.u32 %v444, %v445
    %vm447 = vcmp.lt.s32.totalorder %v428, 1
    %vm448 = vcmp.lt.s32.totalorder %v428, 2
    %vm449 = vcmp.lt.s32.totalorder %v428, 3
    %vm450 = vcmp.lt.s32.totalorder %v428, 4
    %v451 = vsel %vm447, %v431, %v434
    %v452 = vsel %vm450, %v440, 2102212464
    %v453 = vsel %vm449, %v437, %v452
    %v454 = vsel %vm448, %v451, %v453
    %v455 = vsel %vm447, %v434, %v437
    %v456 = vsel %vm450, %v443, 920167782
    %v457 = vsel %vm449, %v440, %v456
    %v458 = vsel %vm448, %v455, %v457
    %v459 = vsel %vm447, %v437, %v440
    %v460 = vsel %vm450, %v446, 1326507024
    %v461 = vsel %vm449, %v443, %v460
    %v462 = vsel %vm448, %v459, %v461
    %v463 = vshll.u32 %v423, 8
    %v464 = vmul.u32.u64.compose %v463, %v462
    %v465 = vextract.low.u32 %v464
    %v466 = vextract.high.u32 %v464
    %v467 = vmul.u32.u64.compose %v463, %v458
    %v468 = vextract.low.u32 %v467
    %v469 = vextract.high.u32 %v467
    %v470 = vmul.u32 %v463, %v454
    %v471 = vadd.s32 %v466, %v468
    %vm472 = vc.u32 %v466, %v468
    %v473 = vadd.s32 %v469, 1
    %v474 = vsel %vm472, %v473, %v469
    %v475 = vadd.s32 %v470, %v474
    %v476 = vadd.s32 %v475, 536870912
    %v477 = vshrl.u32 %v476, 30
    %v478 = vshll.u32 %v477, 30
    %v479 = vsub.s32 %v475, %v478
    %vm480 = vcmp.lt.s32.totalorder %v479, 0
    %v481 = vsub.s32 0, %v479
    %v482 = vsel %vm480, %v481, %v479
    %v483 = vclz %v482
    %v484 = vsub.s32 %v483, 2
    %vm485 = vcmp.gt.s32.totalorder 0, %v484
    %v486 = vsel %vm485, 0, %v484
    %v487 = vsub.s32 32, %v486
    %v488 = vshll.u32 %v479, %v486
    %v489 = vshrl.u32 %v471, %v487
    %v490 = vor.u32 %v488, %v489
    %v491 = vsub.s32 4294967266, %v486
    %v492 = vadd.s32 %v491, 127
    %v493 = vshll.u32 %v492, 23
    %v494 = vor.u32 4788187, %v493
    %v495 = vand.u32 2147483647, %v494
    %v497 = vcvt.s32.f32 %v490
    %v498 = vmul.f32 %v497, %v495
    %v499 = vxor.u32 %v498, 2147483648
    %v500 = vsel %vm417, %v499, %v498
    %v501 = vsub.s32 4, %v477
    %v502 = vsel %vm417, %v501, %v477
    %v503 = vsel %vm416, %v90, %v500
    %v504 = vsel %vm416, 0, %v502
    %v505 = vcosq.f32.pop %v503
    %v506 = vsinq.f32.pop %v503
    %vm507 = vweird.f32 %v90
    %v508 = vadd.s32 %v504, 3
    %v509 = vand.u32 %v508, 3
    %vm510 = vcmp.lt.s32.totalorder %v509, 2
    %vm511 = vcmp.eq.s32.totalorder %v509, 0
    %v512 = vxor.u32 %v506, 2147483648
    %v513 = vsel %vm511, %v505, %v512
    %vm514 = vcmp.eq.s32.totalorder %v509, 2
    %v515 = vxor.u32 %v505, 2147483648
    %v516 = vsel %vm514, %v515, %v506
    %v517 = vsel %vm510, %v513, %v516
    %v518 = vsel %vm507, nan, %v517
    %v519 = vand.u32 2147483647, %v91
    %vm520 = vcmp.le.f32.partialorder %v519, 0.7853982
    %vm521 = vcmp.lt.s32.totalorder %v91, 0
    %v522 = vand.u32 %v91, 2139095040
    %v523 = vshrl.u32 %v522, 23
    %v524 = vsub.s32 %v523, 127
    %v525 = vand.u32 2147483647, %v91
    %v526 = vand.u32 %v525, 8388607
    %v527 = vor.u32 %v526, 8388608
    %v528 = vsub.s32 0, %v527
    %v529 = vadd.s32 %v524, 1
    %vm530 = vcmp.gt.s32.totalorder %v529, 0
    %v531 = vsel %vm530, %v529, 0
    %v532 = vshrl.u32 %v531, 5
    %v533 = vand.u32 %v531, 31
    %v534 = vsub.s32 32, %v533
    %v535 = vshrl.u32 683565275, %v534
    %v536 = vshll.u32 683565275, %v533
    %v537 = vshrl.u32 2475754826, %v534
    %v538 = vor.u32 %v536, %v537
    %v539 = vshll.u32 2475754826, %v533
    %v540 = vshrl.u32 2131351028, %v534
    %v541 = vor.u32 %v539, %v540
    %v542 = vshll.u32 2131351028, %v533
    %v543 = vshrl.u32 2102212464, %v534
    %v544 = vor.u32 %v542, %v543
    %v545 = vshll.u32 2102212464, %v533
    %v546 = vshrl.u32 920167782, %v534
    %v547 = vor.u32 %v545, %v546
    %v548 = vshll.u32 920167782, %v533
    %v549 = vshrl.u32 1326507024, %v534
    %v550 = vor.u32 %v548, %v549
    %vm551 = vcmp.lt.s32.totalorder %v532, 1
    %vm552 = vcmp.lt.s32.totalorder %v532, 2
    %vm553 = vcmp.lt.s32.totalorder %v532, 3
    %vm554 = vcmp.lt.s32.totalorder %v532, 4
    %v555 = vsel %vm551, %v535, %v538
    %v556 = vsel %vm554, %v544, 2102212464
    %v557 = vsel %vm553, %v541, %v556
    %v558 = vsel %vm552, %v555, %v557
    %v559 = vsel %vm551, %v538, %v541
    %v560 = vsel %vm554, %v547, 920167782
    %v561 = vsel %vm553, %v544, %v560
    %v562 = vsel %vm552, %v559, %v561
    %v563 = vsel %vm551, %v541, %v544
    %v564 = vsel %vm554, %v550, 1326507024
    %v565 = vsel %vm553, %v547, %v564
    %v566 = vsel %vm552, %v563, %v565
    %v567 = vshll.u32 %v527, 8
    %v568 = vmul.u32.u64.compose %v567, %v566
    %v569 = vextract.low.u32 %v568
    %v570 = vextract.high.u32 %v568
    %v571 = vmul.u32.u64.compose %v567, %v562
    %v572 = vextract.low.u32 %v571
    %v573 = vextract.high.u32 %v571
    %v574 = vmul.u32 %v567, %v558
    %v575 = vadd.s32 %v570, %v572
    %vm576 = vc.u32 %v570, %v572
    %v577 = vadd.s32 %v573, 1
    %v578 = vsel %vm576, %v577, %v573
    %v579 = vadd.s32 %v574, %v578
    %v580 = vadd.s32 %v579, 536870912
    %v581 = vshrl.u32 %v580, 30
    %v582 = vshll.u32 %v581, 30
    %v583 = vsub.s32 %v579, %v582
    %vm584 = vcmp.lt.s32.totalorder %v583, 0
    %v585 = vsub.s32 0, %v583
    %v586 = vsel %vm584, %v585, %v583
    %v587 = vclz %v586
    %v588 = vsub.s32 %v587, 2
    %vm589 = vcmp.gt.s32.totalorder 0, %v588
    %v590 = vsel %vm589, 0, %v588
    %v591 = vsub.s32 32, %v590
    %v592 = vshll.u32 %v583, %v590
    %v593 = vshrl.u32 %v575, %v591
    %v594 = vor.u32 %v592, %v593
    %v595 = vsub.s32 4294967266, %v590
    %v596 = vadd.s32 %v595, 127
    %v597 = vshll.u32 %v596, 23
    %v598 = vor.u32 4788187, %v597
    %v599 = vand.u32 2147483647, %v598
    %v601 = vcvt.s32.f32 %v594
    %v602 = vmul.f32 %v601, %v599
    %v603 = vxor.u32 %v602, 2147483648
    %v604 = vsel %vm521, %v603, %v602
    %v605 = vsub.s32 4, %v581
    %v606 = vsel %vm521, %v605, %v581
    %v607 = vsel %vm520, %v91, %v604
    %v608 = vsel %vm520, 0, %v606
    %v609 = vcosq.f32.pop %v607
    %v610 = vsinq.f32.pop %v607
    %vm611 = vweird.f32 %v91
    %v612 = vadd.s32 %v608, 3
    %v613 = vand.u32 %v612, 3
    %vm614 = vcmp.lt.s32.totalorder %v613, 2
    %vm615 = vcmp.eq.s32.totalorder %v613, 0
    %v616 = vxor.u32 %v610, 2147483648
    %v617 = vsel %vm615, %v609, %v616
    %vm618 = vcmp.eq.s32.totalorder %v613, 2
    %v619 = vxor.u32 %v609, 2147483648
    %v620 = vsel %vm618, %v619, %v610
    %v621 = vsel %vm614, %v617, %v620
    %v622 = vsel %vm611, nan, %v621
    %v623 = vand.u32 2147483647, %v92
    %vm624 = vcmp.le.f32.partialorder %v623, 0.7853982
    %vm625 = vcmp.lt.s32.totalorder %v92, 0
    %v626 = vand.u32 %v92, 2139095040
    %v627 = vshrl.u32 %v626, 23
    %v628 = vsub.s32 %v627, 127
    %v629 = vand.u32 2147483647, %v92
    %v630 = vand.u32 %v629, 8388607
    %v631 = vor.u32 %v630, 8388608
    %v632 = vsub.s32 0, %v631
    %v633 = vadd.s32 %v628, 1
    %vm634 = vcmp.gt.s32.totalorder %v633, 0
    %v635 = vsel %vm634, %v633, 0
    %v636 = vshrl.u32 %v635, 5
    %v637 = vand.u32 %v635, 31
    %v638 = vsub.s32 32, %v637
    %v639 = vshrl.u32 683565275, %v638
    %v640 = vshll.u32 683565275, %v637
    %v641 = vshrl.u32 2475754826, %v638
    %v642 = vor.u32 %v640, %v641
    %v643 = vshll.u32 2475754826, %v637
    %v644 = vshrl.u32 2131351028, %v638
    %v645 = vor.u32 %v643, %v644
    %v646 = vshll.u32 2131351028, %v637
    %v647 = vshrl.u32 2102212464, %v638
    %v648 = vor.u32 %v646, %v647
    %v649 = vshll.u32 2102212464, %v637
    %v650 = vshrl.u32 920167782, %v638
    %v651 = vor.u32 %v649, %v650
    %v652 = vshll.u32 920167782, %v637
    %v653 = vshrl.u32 1326507024, %v638
    %v654 = vor.u32 %v652, %v653
    %vm655 = vcmp.lt.s32.totalorder %v636, 1
    %vm656 = vcmp.lt.s32.totalorder %v636, 2
    %vm657 = vcmp.lt.s32.totalorder %v636, 3
    %vm658 = vcmp.lt.s32.totalorder %v636, 4
    %v659 = vsel %vm655, %v639, %v642
    %v660 = vsel %vm658, %v648, 2102212464
    %v661 = vsel %vm657, %v645, %v660
    %v662 = vsel %vm656, %v659, %v661
    %v663 = vsel %vm655, %v642, %v645
    %v664 = vsel %vm658, %v651, 920167782
    %v665 = vsel %vm657, %v648, %v664
    %v666 = vsel %vm656, %v663, %v665
    %v667 = vsel %vm655, %v645, %v648
    %v668 = vsel %vm658, %v654, 1326507024
    %v669 = vsel %vm657, %v651, %v668
    %v670 = vsel %vm656, %v667, %v669
    %v671 = vshll.u32 %v631, 8
    %v672 = vmul.u32.u64.compose %v671, %v670
    %v673 = vextract.low.u32 %v672
    %v674 = vextract.high.u32 %v672
    %v675 = vmul.u32.u64.compose %v671, %v666
    %v676 = vextract.low.u32 %v675
    %v677 = vextract.high.u32 %v675
    %v678 = vmul.u32 %v671, %v662
    %v679 = vadd.s32 %v674, %v676
    %vm680 = vc.u32 %v674, %v676
    %v681 = vadd.s32 %v677, 1
    %v682 = vsel %vm680, %v681, %v677
    %v683 = vadd.s32 %v678, %v682
    %v684 = vadd.s32 %v683, 536870912
    %v685 = vshrl.u32 %v684, 30
    %v686 = vshll.u32 %v685, 30
    %v687 = vsub.s32 %v683, %v686
    %vm688 = vcmp.lt.s32.totalorder %v687, 0
    %v689 = vsub.s32 0, %v687
    %v690 = vsel %vm688, %v689, %v687
    %v691 = vclz %v690
    %v692 = vsub.s32 %v691, 2
    %vm693 = vcmp.gt.s32.totalorder 0, %v692
    %v694 = vsel %vm693, 0, %v692
    %v695 = vsub.s32 32, %v694
    %v696 = vshll.u32 %v687, %v694
    %v697 = vshrl.u32 %v679, %v695
    %v698 = vor.u32 %v696, %v697
    %v699 = vsub.s32 4294967266, %v694
    %v700 = vadd.s32 %v699, 127
    %v701 = vshll.u32 %v700, 23
    %v702 = vor.u32 4788187, %v701
    %v703 = vand.u32 2147483647, %v702
    %v705 = vcvt.s32.f32 %v698
    %v706 = vmul.f32 %v705, %v703
    %v707 = vxor.u32 %v706, 2147483648
    %v708 = vsel %vm625, %v707, %v706
    %v709 = vsub.s32 4, %v685
    %v710 = vsel %vm625, %v709, %v685
    %v711 = vsel %vm624, %v92, %v708
    %v712 = vsel %vm624, 0, %v710
    %v713 = vcosq.f32.pop %v711
    %v714 = vsinq.f32.pop %v711
    %vm715 = vweird.f32 %v92
    %v716 = vadd.s32 %v712, 3
    %v717 = vand.u32 %v716, 3
    %vm718 = vcmp.lt.s32.totalorder %v717, 2
    %vm719 = vcmp.eq.s32.totalorder %v717, 0
    %v720 = vxor.u32 %v714, 2147483648
    %v721 = vsel %vm719, %v713, %v720
    %vm722 = vcmp.eq.s32.totalorder %v717, 2
    %v723 = vxor.u32 %v713, 2147483648
    %v724 = vsel %vm722, %v723, %v714
    %v725 = vsel %vm718, %v721, %v724
    %v726 = vsel %vm715, nan, %v725
    %v727 = vand.u32 2147483647, %v93
    %vm728 = vcmp.le.f32.partialorder %v727, 0.7853982
    %vm729 = vcmp.lt.s32.totalorder %v93, 0
    %v730 = vand.u32 %v93, 2139095040
    %v731 = vshrl.u32 %v730, 23
    %v732 = vsub.s32 %v731, 127
    %v733 = vand.u32 2147483647, %v93
    %v734 = vand.u32 %v733, 8388607
    %v735 = vor.u32 %v734, 8388608
    %v736 = vsub.s32 0, %v735
    %v737 = vadd.s32 %v732, 1
    %vm738 = vcmp.gt.s32.totalorder %v737, 0
    %v739 = vsel %vm738, %v737, 0
    %v740 = vshrl.u32 %v739, 5
    %v741 = vand.u32 %v739, 31
    %v742 = vsub.s32 32, %v741
    %v743 = vshrl.u32 683565275, %v742
    %v744 = vshll.u32 683565275, %v741
    %v745 = vshrl.u32 2475754826, %v742
    %v746 = vor.u32 %v744, %v745
    %v747 = vshll.u32 2475754826, %v741
    %v748 = vshrl.u32 2131351028, %v742
    %v749 = vor.u32 %v747, %v748
    %v750 = vshll.u32 2131351028, %v741
    %v751 = vshrl.u32 2102212464, %v742
    %v752 = vor.u32 %v750, %v751
    %v753 = vshll.u32 2102212464, %v741
    %v754 = vshrl.u32 920167782, %v742
    %v755 = vor.u32 %v753, %v754
    %v756 = vshll.u32 920167782, %v741
    %v757 = vshrl.u32 1326507024, %v742
    %v758 = vor.u32 %v756, %v757
    %vm759 = vcmp.lt.s32.totalorder %v740, 1
    %vm760 = vcmp.lt.s32.totalorder %v740, 2
    %vm761 = vcmp.lt.s32.totalorder %v740, 3
    %vm762 = vcmp.lt.s32.totalorder %v740, 4
    %v763 = vsel %vm759, %v743, %v746
    %v764 = vsel %vm762, %v752, 2102212464
    %v765 = vsel %vm761, %v749, %v764
    %v766 = vsel %vm760, %v763, %v765
    %v767 = vsel %vm759, %v746, %v749
    %v768 = vsel %vm762, %v755, 920167782
    %v769 = vsel %vm761, %v752, %v768
    %v770 = vsel %vm760, %v767, %v769
    %v771 = vsel %vm759, %v749, %v752
    %v772 = vsel %vm762, %v758, 1326507024
    %v773 = vsel %vm761, %v755, %v772
    %v774 = vsel %vm760, %v771, %v773
    %v775 = vshll.u32 %v735, 8
    %v776 = vmul.u32.u64.compose %v775, %v774
    %v777 = vextract.low.u32 %v776
    %v778 = vextract.high.u32 %v776
    %v779 = vmul.u32.u64.compose %v775, %v770
    %v780 = vextract.low.u32 %v779
    %v781 = vextract.high.u32 %v779
    %v782 = vmul.u32 %v775, %v766
    %v783 = vadd.s32 %v778, %v780
    %vm784 = vc.u32 %v778, %v780
    %v785 = vadd.s32 %v781, 1
    %v786 = vsel %vm784, %v785, %v781
    %v787 = vadd.s32 %v782, %v786
    %v788 = vadd.s32 %v787, 536870912
    %v789 = vshrl.u32 %v788, 30
    %v790 = vshll.u32 %v789, 30
    %v791 = vsub.s32 %v787, %v790
    %vm792 = vcmp.lt.s32.totalorder %v791, 0
    %v793 = vsub.s32 0, %v791
    %v794 = vsel %vm792, %v793, %v791
    %v795 = vclz %v794
    %v796 = vsub.s32 %v795, 2
    %vm797 = vcmp.gt.s32.totalorder 0, %v796
    %v798 = vsel %vm797, 0, %v796
    %v799 = vsub.s32 32, %v798
    %v800 = vshll.u32 %v791, %v798
    %v801 = vshrl.u32 %v783, %v799
    %v802 = vor.u32 %v800, %v801
    %v803 = vsub.s32 4294967266, %v798
    %v804 = vadd.s32 %v803, 127
    %v805 = vshll.u32 %v804, 23
    %v806 = vor.u32 4788187, %v805
    %v807 = vand.u32 2147483647, %v806
    %v809 = vcvt.s32.f32 %v802
    %v810 = vmul.f32 %v809, %v807
    %v811 = vxor.u32 %v810, 2147483648
    %v812 = vsel %vm729, %v811, %v810
    %v813 = vsub.s32 4, %v789
    %v814 = vsel %vm729, %v813, %v789
    %v815 = vsel %vm728, %v93, %v812
    %v816 = vsel %vm728, 0, %v814
    %v817 = vcosq.f32.pop %v815
    %v818 = vsinq.f32.pop %v815
    %vm819 = vweird.f32 %v93
    %v820 = vadd.s32 %v816, 3
    %v821 = vand.u32 %v820, 3
    %vm822 = vcmp.lt.s32.totalorder %v821, 2
    %vm823 = vcmp.eq.s32.totalorder %v821, 0
    %v824 = vxor.u32 %v818, 2147483648
    %v825 = vsel %vm823, %v817, %v824
    %vm826 = vcmp.eq.s32.totalorder %v821, 2
    %v827 = vxor.u32 %v817, 2147483648
    %v828 = vsel %vm826, %v827, %v818
    %v829 = vsel %vm822, %v825, %v828
    %v830 = vsel %vm819, nan, %v829
    %v831 = vand.u32 2147483647, %v94
    %vm832 = vcmp.le.f32.partialorder %v831, 0.7853982
    %vm833 = vcmp.lt.s32.totalorder %v94, 0
    %v834 = vand.u32 %v94, 2139095040
    %v835 = vshrl.u32 %v834, 23
    %v836 = vsub.s32 %v835, 127
    %v837 = vand.u32 2147483647, %v94
    %v838 = vand.u32 %v837, 8388607
    %v839 = vor.u32 %v838, 8388608
    %v840 = vsub.s32 0, %v839
    %v841 = vadd.s32 %v836, 1
    %vm842 = vcmp.gt.s32.totalorder %v841, 0
    %v843 = vsel %vm842, %v841, 0
    %v844 = vshrl.u32 %v843, 5
    %v845 = vand.u32 %v843, 31
    %v846 = vsub.s32 32, %v845
    %v847 = vshrl.u32 683565275, %v846
    %v848 = vshll.u32 683565275, %v845
    %v849 = vshrl.u32 2475754826, %v846
    %v850 = vor.u32 %v848, %v849
    %v851 = vshll.u32 2475754826, %v845
    %v852 = vshrl.u32 2131351028, %v846
    %v853 = vor.u32 %v851, %v852
    %v854 = vshll.u32 2131351028, %v845
    %v855 = vshrl.u32 2102212464, %v846
    %v856 = vor.u32 %v854, %v855
    %v857 = vshll.u32 2102212464, %v845
    %v858 = vshrl.u32 920167782, %v846
    %v859 = vor.u32 %v857, %v858
    %v860 = vshll.u32 920167782, %v845
    %v861 = vshrl.u32 1326507024, %v846
    %v862 = vor.u32 %v860, %v861
    %vm863 = vcmp.lt.s32.totalorder %v844, 1
    %vm864 = vcmp.lt.s32.totalorder %v844, 2
    %vm865 = vcmp.lt.s32.totalorder %v844, 3
    %vm866 = vcmp.lt.s32.totalorder %v844, 4
    %v867 = vsel %vm863, %v847, %v850
    %v868 = vsel %vm866, %v856, 2102212464
    %v869 = vsel %vm865, %v853, %v868
    %v870 = vsel %vm864, %v867, %v869
    %v871 = vsel %vm863, %v850, %v853
    %v872 = vsel %vm866, %v859, 920167782
    %v873 = vsel %vm865, %v856, %v872
    %v874 = vsel %vm864, %v871, %v873
    %v875 = vsel %vm863, %v853, %v856
    %v876 = vsel %vm866, %v862, 1326507024
    %v877 = vsel %vm865, %v859, %v876
    %v878 = vsel %vm864, %v875, %v877
    %v879 = vshll.u32 %v839, 8
    %v880 = vmul.u32.u64.compose %v879, %v878
    %v881 = vextract.low.u32 %v880
    %v882 = vextract.high.u32 %v880
    %v883 = vmul.u32.u64.compose %v879, %v874
    %v884 = vextract.low.u32 %v883
    %v885 = vextract.high.u32 %v883
    %v886 = vmul.u32 %v879, %v870
    %v887 = vadd.s32 %v882, %v884
    %vm888 = vc.u32 %v882, %v884
    %v889 = vadd.s32 %v885, 1
    %v890 = vsel %vm888, %v889, %v885
    %v891 = vadd.s32 %v886, %v890
    %v892 = vadd.s32 %v891, 536870912
    %v893 = vshrl.u32 %v892, 30
    %v894 = vshll.u32 %v893, 30
    %v895 = vsub.s32 %v891, %v894
    %vm896 = vcmp.lt.s32.totalorder %v895, 0
    %v897 = vsub.s32 0, %v895
    %v898 = vsel %vm896, %v897, %v895
    %v899 = vclz %v898
    %v900 = vsub.s32 %v899, 2
    %vm901 = vcmp.gt.s32.totalorder 0, %v900
    %v902 = vsel %vm901, 0, %v900
    %v903 = vsub.s32 32, %v902
    %v904 = vshll.u32 %v895, %v902
    %v905 = vshrl.u32 %v887, %v903
    %v906 = vor.u32 %v904, %v905
    %v907 = vsub.s32 4294967266, %v902
    %v908 = vadd.s32 %v907, 127
    %v909 = vshll.u32 %v908, 23
    %v910 = vor.u32 4788187, %v909
    %v911 = vand.u32 2147483647, %v910
    %v913 = vcvt.s32.f32 %v906
    %v914 = vmul.f32 %v913, %v911
    %v915 = vxor.u32 %v914, 2147483648
    %v916 = vsel %vm833, %v915, %v914
    %v917 = vsub.s32 4, %v893
    %v918 = vsel %vm833, %v917, %v893
    %v919 = vsel %vm832, %v94, %v916
    %v920 = vsel %vm832, 0, %v918
    %v921 = vcosq.f32.pop %v919
    %v922 = vsinq.f32.pop %v919
    %vm923 = vweird.f32 %v94
    %v924 = vadd.s32 %v920, 3
    %v925 = vand.u32 %v924, 3
    %vm926 = vcmp.lt.s32.totalorder %v925, 2
    %vm927 = vcmp.eq.s32.totalorder %v925, 0
    %v928 = vxor.u32 %v922, 2147483648
    %v929 = vsel %vm927, %v921, %v928
    %vm930 = vcmp.eq.s32.totalorder %v925, 2
    %v931 = vxor.u32 %v921, 2147483648
    %v932 = vsel %vm930, %v931, %v922
    %v933 = vsel %vm926, %v929, %v932
    %v934 = vsel %vm923, nan, %v933
    %v935 = vand.u32 2147483647, %v95
    %vm936 = vcmp.le.f32.partialorder %v935, 0.7853982
    %vm937 = vcmp.lt.s32.totalorder %v95, 0
    %v938 = vand.u32 %v95, 2139095040
    %v939 = vshrl.u32 %v938, 23
    %v940 = vsub.s32 %v939, 127
    %v941 = vand.u32 2147483647, %v95
    %v942 = vand.u32 %v941, 8388607
    %v943 = vor.u32 %v942, 8388608
    %v944 = vsub.s32 0, %v943
    %v945 = vadd.s32 %v940, 1
    %vm946 = vcmp.gt.s32.totalorder %v945, 0
    %v947 = vsel %vm946, %v945, 0
    %v948 = vshrl.u32 %v947, 5
    %v949 = vand.u32 %v947, 31
    %v950 = vsub.s32 32, %v949
    %v951 = vshrl.u32 683565275, %v950
    %v952 = vshll.u32 683565275, %v949
    %v953 = vshrl.u32 2475754826, %v950
    %v954 = vor.u32 %v952, %v953
    %v955 = vshll.u32 2475754826, %v949
    %v956 = vshrl.u32 2131351028, %v950
    %v957 = vor.u32 %v955, %v956
    %v958 = vshll.u32 2131351028, %v949
    %v959 = vshrl.u32 2102212464, %v950
    %v960 = vor.u32 %v958, %v959
    %v961 = vshll.u32 2102212464, %v949
    %v962 = vshrl.u32 920167782, %v950
    %v963 = vor.u32 %v961, %v962
    %v964 = vshll.u32 920167782, %v949
    %v965 = vshrl.u32 1326507024, %v950
    %v966 = vor.u32 %v964, %v965
    %vm967 = vcmp.lt.s32.totalorder %v948, 1
    %vm968 = vcmp.lt.s32.totalorder %v948, 2
    %vm969 = vcmp.lt.s32.totalorder %v948, 3
    %vm970 = vcmp.lt.s32.totalorder %v948, 4
    %v971 = vsel %vm967, %v951, %v954
    %v972 = vsel %vm970, %v960, 2102212464
    %v973 = vsel %vm969, %v957, %v972
    %v974 = vsel %vm968, %v971, %v973
    %v975 = vsel %vm967, %v954, %v957
    %v976 = vsel %vm970, %v963, 920167782
    %v977 = vsel %vm969, %v960, %v976
    %v978 = vsel %vm968, %v975, %v977
    %v979 = vsel %vm967, %v957, %v960
    %v980 = vsel %vm970, %v966, 1326507024
    %v981 = vsel %vm969, %v963, %v980
    %v982 = vsel %vm968, %v979, %v981
    %v983 = vshll.u32 %v943, 8
    %v984 = vmul.u32.u64.compose %v983, %v982
    %v985 = vextract.low.u32 %v984
    %v986 = vextract.high.u32 %v984
    %v987 = vmul.u32.u64.compose %v983, %v978
    %v988 = vextract.low.u32 %v987
    %v989 = vextract.high.u32 %v987
    %v990 = vmul.u32 %v983, %v974
    %v991 = vadd.s32 %v986, %v988
    %vm992 = vc.u32 %v986, %v988
    %v993 = vadd.s32 %v989, 1
    %v994 = vsel %vm992, %v993, %v989
    %v995 = vadd.s32 %v990, %v994
    %v996 = vadd.s32 %v995, 536870912
    %v997 = vshrl.u32 %v996, 30
    %v998 = vshll.u32 %v997, 30
    %v999 = vsub.s32 %v995, %v998
    %vm1000 = vcmp.lt.s32.totalorder %v999, 0
    %v1001 = vsub.s32 0, %v999
    %v1002 = vsel %vm1000, %v1001, %v999
    %v1003 = vclz %v1002
    %v1004 = vsub.s32 %v1003, 2
    %vm1005 = vcmp.gt.s32.totalorder 0, %v1004
    %v1006 = vsel %vm1005, 0, %v1004
    %v1007 = vsub.s32 32, %v1006
    %v1008 = vshll.u32 %v999, %v1006
    %v1009 = vshrl.u32 %v991, %v1007
    %v1010 = vor.u32 %v1008, %v1009
    %v1011 = vsub.s32 4294967266, %v1006
    %v1012 = vadd.s32 %v1011, 127
    %v1013 = vshll.u32 %v1012, 23
    %v1014 = vor.u32 4788187, %v1013
    %v1015 = vand.u32 2147483647, %v1014
    %v1017 = vcvt.s32.f32 %v1010
    %v1018 = vmul.f32 %v1017, %v1015
    %v1019 = vxor.u32 %v1018, 2147483648
    %v1020 = vsel %vm937, %v1019, %v1018
    %v1021 = vsub.s32 4, %v997
    %v1022 = vsel %vm937, %v1021, %v997
    %v1023 = vsel %vm936, %v95, %v1020
    %v1024 = vsel %vm936, 0, %v1022
    %v1025 = vcosq.f32.pop %v1023
    %v1026 = vsinq.f32.pop %v1023
    %vm1027 = vweird.f32 %v95
    %v1028 = vadd.s32 %v1024, 3
    %v1029 = vand.u32 %v1028, 3
    %vm1030 = vcmp.lt.s32.totalorder %v1029, 2
    %vm1031 = vcmp.eq.s32.totalorder %v1029, 0
    %v1032 = vxor.u32 %v1026, 2147483648
    %v1033 = vsel %vm1031, %v1025, %v1032
    %vm1034 = vcmp.eq.s32.totalorder %v1029, 2
    %v1035 = vxor.u32 %v1025, 2147483648
    %v1036 = vsel %vm1034, %v1035, %v1026
    %v1037 = vsel %vm1030, %v1033, %v1036
    %v1038 = vsel %vm1027, nan, %v1037
    %v1039 = vand.u32 2147483647, %v96
    %vm1040 = vcmp.le.f32.partialorder %v1039, 0.7853982
    %vm1041 = vcmp.lt.s32.totalorder %v96, 0
    %v1042 = vand.u32 %v96, 2139095040
    %v1043 = vshrl.u32 %v1042, 23
    %v1044 = vsub.s32 %v1043, 127
    %v1045 = vand.u32 2147483647, %v96
    %v1046 = vand.u32 %v1045, 8388607
    %v1047 = vor.u32 %v1046, 8388608
    %v1048 = vsub.s32 0, %v1047
    %v1049 = vadd.s32 %v1044, 1
    %vm1050 = vcmp.gt.s32.totalorder %v1049, 0
    %v1051 = vsel %vm1050, %v1049, 0
    %v1052 = vshrl.u32 %v1051, 5
    %v1053 = vand.u32 %v1051, 31
    %v1054 = vsub.s32 32, %v1053
    %v1055 = vshrl.u32 683565275, %v1054
    %v1056 = vshll.u32 683565275, %v1053
    %v1057 = vshrl.u32 2475754826, %v1054
    %v1058 = vor.u32 %v1056, %v1057
    %v1059 = vshll.u32 2475754826, %v1053
    %v1060 = vshrl.u32 2131351028, %v1054
    %v1061 = vor.u32 %v1059, %v1060
    %v1062 = vshll.u32 2131351028, %v1053
    %v1063 = vshrl.u32 2102212464, %v1054
    %v1064 = vor.u32 %v1062, %v1063
    %v1065 = vshll.u32 2102212464, %v1053
    %v1066 = vshrl.u32 920167782, %v1054
    %v1067 = vor.u32 %v1065, %v1066
    %v1068 = vshll.u32 920167782, %v1053
    %v1069 = vshrl.u32 1326507024, %v1054
    %v1070 = vor.u32 %v1068, %v1069
    %vm1071 = vcmp.lt.s32.totalorder %v1052, 1
    %vm1072 = vcmp.lt.s32.totalorder %v1052, 2
    %vm1073 = vcmp.lt.s32.totalorder %v1052, 3
    %vm1074 = vcmp.lt.s32.totalorder %v1052, 4
    %v1075 = vsel %vm1071, %v1055, %v1058
    %v1076 = vsel %vm1074, %v1064, 2102212464
    %v1077 = vsel %vm1073, %v1061, %v1076
    %v1078 = vsel %vm1072, %v1075, %v1077
    %v1079 = vsel %vm1071, %v1058, %v1061
    %v1080 = vsel %vm1074, %v1067, 920167782
    %v1081 = vsel %vm1073, %v1064, %v1080
    %v1082 = vsel %vm1072, %v1079, %v1081
    %v1083 = vsel %vm1071, %v1061, %v1064
    %v1084 = vsel %vm1074, %v1070, 1326507024
    %v1085 = vsel %vm1073, %v1067, %v1084
    %v1086 = vsel %vm1072, %v1083, %v1085
    %v1087 = vshll.u32 %v1047, 8
    %v1088 = vmul.u32.u64.compose %v1087, %v1086
    %v1089 = vextract.low.u32 %v1088
    %v1090 = vextract.high.u32 %v1088
    %v1091 = vmul.u32.u64.compose %v1087, %v1082
    %v1092 = vextract.low.u32 %v1091
    %v1093 = vextract.high.u32 %v1091
    %v1094 = vmul.u32 %v1087, %v1078
    %v1095 = vadd.s32 %v1090, %v1092
    %vm1096 = vc.u32 %v1090, %v1092
    %v1097 = vadd.s32 %v1093, 1
    %v1098 = vsel %vm1096, %v1097, %v1093
    %v1099 = vadd.s32 %v1094, %v1098
    %v1100 = vadd.s32 %v1099, 536870912
    %v1101 = vshrl.u32 %v1100, 30
    %v1102 = vshll.u32 %v1101, 30
    %v1103 = vsub.s32 %v1099, %v1102
    %vm1104 = vcmp.lt.s32.totalorder %v1103, 0
    %v1105 = vsub.s32 0, %v1103
    %v1106 = vsel %vm1104, %v1105, %v1103
    %v1107 = vclz %v1106
    %v1108 = vsub.s32 %v1107, 2
    %vm1109 = vcmp.gt.s32.totalorder 0, %v1108
    %v1110 = vsel %vm1109, 0, %v1108
    %v1111 = vsub.s32 32, %v1110
    %v1112 = vshll.u32 %v1103, %v1110
    %v1113 = vshrl.u32 %v1095, %v1111
    %v1114 = vor.u32 %v1112, %v1113
    %v1115 = vsub.s32 4294967266, %v1110
    %v1116 = vadd.s32 %v1115, 127
    %v1117 = vshll.u32 %v1116, 23
    %v1118 = vor.u32 4788187, %v1117
    %v1119 = vand.u32 2147483647, %v1118
    %v1121 = vcvt.s32.f32 %v1114
    %v1122 = vmul.f32 %v1121, %v1119
    %v1123 = vxor.u32 %v1122, 2147483648
    %v1124 = vsel %vm1041, %v1123, %v1122
    %v1125 = vsub.s32 4, %v1101
    %v1126 = vsel %vm1041, %v1125, %v1101
    %v1127 = vsel %vm1040, %v96, %v1124
    %v1128 = vsel %vm1040, 0, %v1126
    %v1129 = vcosq.f32.pop %v1127
    %v1130 = vsinq.f32.pop %v1127
    %vm1131 = vweird.f32 %v96
    %v1132 = vadd.s32 %v1128, 3
    %v1133 = vand.u32 %v1132, 3
    %vm1134 = vcmp.lt.s32.totalorder %v1133, 2
    %vm1135 = vcmp.eq.s32.totalorder %v1133, 0
    %v1136 = vxor.u32 %v1130, 2147483648
    %v1137 = vsel %vm1135, %v1129, %v1136
    %vm1138 = vcmp.eq.s32.totalorder %v1133, 2
    %v1139 = vxor.u32 %v1129, 2147483648
    %v1140 = vsel %vm1138, %v1139, %v1130
    %v1141 = vsel %vm1134, %v1137, %v1140
    %v1142 = vsel %vm1131, nan, %v1141
    %v1143 = vand.u32 2147483647, %v97
    %vm1144 = vcmp.le.f32.partialorder %v1143, 0.7853982
    %vm1145 = vcmp.lt.s32.totalorder %v97, 0
    %v1146 = vand.u32 %v97, 2139095040
    %v1147 = vshrl.u32 %v1146, 23
    %v1148 = vsub.s32 %v1147, 127
    %v1149 = vand.u32 2147483647, %v97
    %v1150 = vand.u32 %v1149, 8388607
    %v1151 = vor.u32 %v1150, 8388608
    %v1152 = vsub.s32 0, %v1151
    %v1153 = vadd.s32 %v1148, 1
    %vm1154 = vcmp.gt.s32.totalorder %v1153, 0
    %v1155 = vsel %vm1154, %v1153, 0
    %v1156 = vshrl.u32 %v1155, 5
    %v1157 = vand.u32 %v1155, 31
    %v1158 = vsub.s32 32, %v1157
    %v1159 = vshrl.u32 683565275, %v1158
    %v1160 = vshll.u32 683565275, %v1157
    %v1161 = vshrl.u32 2475754826, %v1158
    %v1162 = vor.u32 %v1160, %v1161
    %v1163 = vshll.u32 2475754826, %v1157
    %v1164 = vshrl.u32 2131351028, %v1158
    %v1165 = vor.u32 %v1163, %v1164
    %v1166 = vshll.u32 2131351028, %v1157
    %v1167 = vshrl.u32 2102212464, %v1158
    %v1168 = vor.u32 %v1166, %v1167
    %v1169 = vshll.u32 2102212464, %v1157
    %v1170 = vshrl.u32 920167782, %v1158
    %v1171 = vor.u32 %v1169, %v1170
    %v1172 = vshll.u32 920167782, %v1157
    %v1173 = vshrl.u32 1326507024, %v1158
    %v1174 = vor.u32 %v1172, %v1173
    %vm1175 = vcmp.lt.s32.totalorder %v1156, 1
    %vm1176 = vcmp.lt.s32.totalorder %v1156, 2
    %vm1177 = vcmp.lt.s32.totalorder %v1156, 3
    %vm1178 = vcmp.lt.s32.totalorder %v1156, 4
    %v1179 = vsel %vm1175, %v1159, %v1162
    %v1180 = vsel %vm1178, %v1168, 2102212464
    %v1181 = vsel %vm1177, %v1165, %v1180
    %v1182 = vsel %vm1176, %v1179, %v1181
    %v1183 = vsel %vm1175, %v1162, %v1165
    %v1184 = vsel %vm1178, %v1171, 920167782
    %v1185 = vsel %vm1177, %v1168, %v1184
    %v1186 = vsel %vm1176, %v1183, %v1185
    %v1187 = vsel %vm1175, %v1165, %v1168
    %v1188 = vsel %vm1178, %v1174, 1326507024
    %v1189 = vsel %vm1177, %v1171, %v1188
    %v1190 = vsel %vm1176, %v1187, %v1189
    %v1191 = vshll.u32 %v1151, 8
    %v1192 = vmul.u32.u64.compose %v1191, %v1190
    %v1193 = vextract.low.u32 %v1192
    %v1194 = vextract.high.u32 %v1192
    %v1195 = vmul.u32.u64.compose %v1191, %v1186
    %v1196 = vextract.low.u32 %v1195
    %v1197 = vextract.high.u32 %v1195
    %v1198 = vmul.u32 %v1191, %v1182
    %v1199 = vadd.s32 %v1194, %v1196
    %vm1200 = vc.u32 %v1194, %v1196
    %v1201 = vadd.s32 %v1197, 1
    %v1202 = vsel %vm1200, %v1201, %v1197
    %v1203 = vadd.s32 %v1198, %v1202
    %v1204 = vadd.s32 %v1203, 536870912
    %v1205 = vshrl.u32 %v1204, 30
    %v1206 = vshll.u32 %v1205, 30
    %v1207 = vsub.s32 %v1203, %v1206
    %vm1208 = vcmp.lt.s32.totalorder %v1207, 0
    %v1209 = vsub.s32 0, %v1207
    %v1210 = vsel %vm1208, %v1209, %v1207
    %v1211 = vclz %v1210
    %v1212 = vsub.s32 %v1211, 2
    %vm1213 = vcmp.gt.s32.totalorder 0, %v1212
    %v1214 = vsel %vm1213, 0, %v1212
    %v1215 = vsub.s32 32, %v1214
    %v1216 = vshll.u32 %v1207, %v1214
    %v1217 = vshrl.u32 %v1199, %v1215
    %v1218 = vor.u32 %v1216, %v1217
    %v1219 = vsub.s32 4294967266, %v1214
    %v1220 = vadd.s32 %v1219, 127
    %v1221 = vshll.u32 %v1220, 23
    %v1222 = vor.u32 4788187, %v1221
    %v1223 = vand.u32 2147483647, %v1222
    %v1225 = vcvt.s32.f32 %v1218
    %v1226 = vmul.f32 %v1225, %v1223
    %v1227 = vxor.u32 %v1226, 2147483648
    %v1228 = vsel %vm1145, %v1227, %v1226
    %v1229 = vsub.s32 4, %v1205
    %v1230 = vsel %vm1145, %v1229, %v1205
    %v1231 = vsel %vm1144, %v97, %v1228
    %v1232 = vsel %vm1144, 0, %v1230
    %v1233 = vcosq.f32.pop %v1231
    %v1234 = vsinq.f32.pop %v1231
    %vm1235 = vweird.f32 %v97
    %v1236 = vadd.s32 %v1232, 3
    %v1237 = vand.u32 %v1236, 3
    %vm1238 = vcmp.lt.s32.totalorder %v1237, 2
    %vm1239 = vcmp.eq.s32.totalorder %v1237, 0
    %v1240 = vxor.u32 %v1234, 2147483648
    %v1241 = vsel %vm1239, %v1233, %v1240
    %vm1242 = vcmp.eq.s32.totalorder %v1237, 2
    %v1243 = vxor.u32 %v1233, 2147483648
    %v1244 = vsel %vm1242, %v1243, %v1234
    %v1245 = vsel %vm1238, %v1241, %v1244
    %v1246 = vsel %vm1235, nan, %v1245
    %v1247 = vand.u32 2147483647, %v98
    %vm1248 = vcmp.le.f32.partialorder %v1247, 0.7853982
    %vm1249 = vcmp.lt.s32.totalorder %v98, 0
    %v1250 = vand.u32 %v98, 2139095040
    %v1251 = vshrl.u32 %v1250, 23
    %v1252 = vsub.s32 %v1251, 127
    %v1253 = vand.u32 2147483647, %v98
    %v1254 = vand.u32 %v1253, 8388607
    %v1255 = vor.u32 %v1254, 8388608
    %v1256 = vsub.s32 0, %v1255
    %v1257 = vadd.s32 %v1252, 1
    %vm1258 = vcmp.gt.s32.totalorder %v1257, 0
    %v1259 = vsel %vm1258, %v1257, 0
    %v1260 = vshrl.u32 %v1259, 5
    %v1261 = vand.u32 %v1259, 31
    %v1262 = vsub.s32 32, %v1261
    %v1263 = vshrl.u32 683565275, %v1262
    %v1264 = vshll.u32 683565275, %v1261
    %v1265 = vshrl.u32 2475754826, %v1262
    %v1266 = vor.u32 %v1264, %v1265
    %v1267 = vshll.u32 2475754826, %v1261
    %v1268 = vshrl.u32 2131351028, %v1262
    %v1269 = vor.u32 %v1267, %v1268
    %v1270 = vshll.u32 2131351028, %v1261
    %v1271 = vshrl.u32 2102212464, %v1262
    %v1272 = vor.u32 %v1270, %v1271
    %v1273 = vshll.u32 2102212464, %v1261
    %v1274 = vshrl.u32 920167782, %v1262
    %v1275 = vor.u32 %v1273, %v1274
    %v1276 = vshll.u32 920167782, %v1261
    %v1277 = vshrl.u32 1326507024, %v1262
    %v1278 = vor.u32 %v1276, %v1277
    %vm1279 = vcmp.lt.s32.totalorder %v1260, 1
    %vm1280 = vcmp.lt.s32.totalorder %v1260, 2
    %vm1281 = vcmp.lt.s32.totalorder %v1260, 3
    %vm1282 = vcmp.lt.s32.totalorder %v1260, 4
    %v1283 = vsel %vm1279, %v1263, %v1266
    %v1284 = vsel %vm1282, %v1272, 2102212464
    %v1285 = vsel %vm1281, %v1269, %v1284
    %v1286 = vsel %vm1280, %v1283, %v1285
    %v1287 = vsel %vm1279, %v1266, %v1269
    %v1288 = vsel %vm1282, %v1275, 920167782
    %v1289 = vsel %vm1281, %v1272, %v1288
    %v1290 = vsel %vm1280, %v1287, %v1289
    %v1291 = vsel %vm1279, %v1269, %v1272
    %v1292 = vsel %vm1282, %v1278, 1326507024
    %v1293 = vsel %vm1281, %v1275, %v1292
    %v1294 = vsel %vm1280, %v1291, %v1293
    %v1295 = vshll.u32 %v1255, 8
    %v1296 = vmul.u32.u64.compose %v1295, %v1294
    %v1297 = vextract.low.u32 %v1296
    %v1298 = vextract.high.u32 %v1296
    %v1299 = vmul.u32.u64.compose %v1295, %v1290
    %v1300 = vextract.low.u32 %v1299
    %v1301 = vextract.high.u32 %v1299
    %v1302 = vmul.u32 %v1295, %v1286
    %v1303 = vadd.s32 %v1298, %v1300
    %vm1304 = vc.u32 %v1298, %v1300
    %v1305 = vadd.s32 %v1301, 1
    %v1306 = vsel %vm1304, %v1305, %v1301
    %v1307 = vadd.s32 %v1302, %v1306
    %v1308 = vadd.s32 %v1307, 536870912
    %v1309 = vshrl.u32 %v1308, 30
    %v1310 = vshll.u32 %v1309, 30
    %v1311 = vsub.s32 %v1307, %v1310
    %vm1312 = vcmp.lt.s32.totalorder %v1311, 0
    %v1313 = vsub.s32 0, %v1311
    %v1314 = vsel %vm1312, %v1313, %v1311
    %v1315 = vclz %v1314
    %v1316 = vsub.s32 %v1315, 2
    %vm1317 = vcmp.gt.s32.totalorder 0, %v1316
    %v1318 = vsel %vm1317, 0, %v1316
    %v1319 = vsub.s32 32, %v1318
    %v1320 = vshll.u32 %v1311, %v1318
    %v1321 = vshrl.u32 %v1303, %v1319
    %v1322 = vor.u32 %v1320, %v1321
    %v1323 = vsub.s32 4294967266, %v1318
    %v1324 = vadd.s32 %v1323, 127
    %v1325 = vshll.u32 %v1324, 23
    %v1326 = vor.u32 4788187, %v1325
    %v1327 = vand.u32 2147483647, %v1326
    %v1329 = vcvt.s32.f32 %v1322
    %v1330 = vmul.f32 %v1329, %v1327
    %v1331 = vxor.u32 %v1330, 2147483648
    %v1332 = vsel %vm1249, %v1331, %v1330
    %v1333 = vsub.s32 4, %v1309
    %v1334 = vsel %vm1249, %v1333, %v1309
    %v1335 = vsel %vm1248, %v98, %v1332
    %v1336 = vsel %vm1248, 0, %v1334
    %v1337 = vcosq.f32.pop %v1335
    %v1338 = vsinq.f32.pop %v1335
    %vm1339 = vweird.f32 %v98
    %v1340 = vadd.s32 %v1336, 3
    %v1341 = vand.u32 %v1340, 3
    %vm1342 = vcmp.lt.s32.totalorder %v1341, 2
    %vm1343 = vcmp.eq.s32.totalorder %v1341, 0
    %v1344 = vxor.u32 %v1338, 2147483648
    %v1345 = vsel %vm1343, %v1337, %v1344
    %vm1346 = vcmp.eq.s32.totalorder %v1341, 2
    %v1347 = vxor.u32 %v1337, 2147483648
    %v1348 = vsel %vm1346, %v1347, %v1338
    %v1349 = vsel %vm1342, %v1345, %v1348
    %v1350 = vsel %vm1339, nan, %v1349
    %v1351 = vand.u32 2147483647, %v99
    %vm1352 = vcmp.le.f32.partialorder %v1351, 0.7853982
    %vm1353 = vcmp.lt.s32.totalorder %v99, 0
    %v1354 = vand.u32 %v99, 2139095040
    %v1355 = vshrl.u32 %v1354, 23
    %v1356 = vsub.s32 %v1355, 127
    %v1357 = vand.u32 2147483647, %v99
    %v1358 = vand.u32 %v1357, 8388607
    %v1359 = vor.u32 %v1358, 8388608
    %v1360 = vsub.s32 0, %v1359
    %v1361 = vadd.s32 %v1356, 1
    %vm1362 = vcmp.gt.s32.totalorder %v1361, 0
    %v1363 = vsel %vm1362, %v1361, 0
    %v1364 = vshrl.u32 %v1363, 5
    %v1365 = vand.u32 %v1363, 31
    %v1366 = vsub.s32 32, %v1365
    %v1367 = vshrl.u32 683565275, %v1366
    %v1368 = vshll.u32 683565275, %v1365
    %v1369 = vshrl.u32 2475754826, %v1366
    %v1370 = vor.u32 %v1368, %v1369
    %v1371 = vshll.u32 2475754826, %v1365
    %v1372 = vshrl.u32 2131351028, %v1366
    %v1373 = vor.u32 %v1371, %v1372
    %v1374 = vshll.u32 2131351028, %v1365
    %v1375 = vshrl.u32 2102212464, %v1366
    %v1376 = vor.u32 %v1374, %v1375
    %v1377 = vshll.u32 2102212464, %v1365
    %v1378 = vshrl.u32 920167782, %v1366
    %v1379 = vor.u32 %v1377, %v1378
    %v1380 = vshll.u32 920167782, %v1365
    %v1381 = vshrl.u32 1326507024, %v1366
    %v1382 = vor.u32 %v1380, %v1381
    %vm1383 = vcmp.lt.s32.totalorder %v1364, 1
    %vm1384 = vcmp.lt.s32.totalorder %v1364, 2
    %vm1385 = vcmp.lt.s32.totalorder %v1364, 3
    %vm1386 = vcmp.lt.s32.totalorder %v1364, 4
    %v1387 = vsel %vm1383, %v1367, %v1370
    %v1388 = vsel %vm1386, %v1376, 2102212464
    %v1389 = vsel %vm1385, %v1373, %v1388
    %v1390 = vsel %vm1384, %v1387, %v1389
    %v1391 = vsel %vm1383, %v1370, %v1373
    %v1392 = vsel %vm1386, %v1379, 920167782
    %v1393 = vsel %vm1385, %v1376, %v1392
    %v1394 = vsel %vm1384, %v1391, %v1393
    %v1395 = vsel %vm1383, %v1373, %v1376
    %v1396 = vsel %vm1386, %v1382, 1326507024
    %v1397 = vsel %vm1385, %v1379, %v1396
    %v1398 = vsel %vm1384, %v1395, %v1397
    %v1399 = vshll.u32 %v1359, 8
    %v1400 = vmul.u32.u64.compose %v1399, %v1398
    %v1401 = vextract.low.u32 %v1400
    %v1402 = vextract.high.u32 %v1400
    %v1403 = vmul.u32.u64.compose %v1399, %v1394
    %v1404 = vextract.low.u32 %v1403
    %v1405 = vextract.high.u32 %v1403
    %v1406 = vmul.u32 %v1399, %v1390
    %v1407 = vadd.s32 %v1402, %v1404
    %vm1408 = vc.u32 %v1402, %v1404
    %v1409 = vadd.s32 %v1405, 1
    %v1410 = vsel %vm1408, %v1409, %v1405
    %v1411 = vadd.s32 %v1406, %v1410
    %v1412 = vadd.s32 %v1411, 536870912
    %v1413 = vshrl.u32 %v1412, 30
    %v1414 = vshll.u32 %v1413, 30
    %v1415 = vsub.s32 %v1411, %v1414
    %vm1416 = vcmp.lt.s32.totalorder %v1415, 0
    %v1417 = vsub.s32 0, %v1415
    %v1418 = vsel %vm1416, %v1417, %v1415
    %v1419 = vclz %v1418
    %v1420 = vsub.s32 %v1419, 2
    %vm1421 = vcmp.gt.s32.totalorder 0, %v1420
    %v1422 = vsel %vm1421, 0, %v1420
    %v1423 = vsub.s32 32, %v1422
    %v1424 = vshll.u32 %v1415, %v1422
    %v1425 = vshrl.u32 %v1407, %v1423
    %v1426 = vor.u32 %v1424, %v1425
    %v1427 = vsub.s32 4294967266, %v1422
    %v1428 = vadd.s32 %v1427, 127
    %v1429 = vshll.u32 %v1428, 23
    %v1430 = vor.u32 4788187, %v1429
    %v1431 = vand.u32 2147483647, %v1430
    %v1433 = vcvt.s32.f32 %v1426
    %v1434 = vmul.f32 %v1433, %v1431
    %v1435 = vxor.u32 %v1434, 2147483648
    %v1436 = vsel %vm1353, %v1435, %v1434
    %v1437 = vsub.s32 4, %v1413
    %v1438 = vsel %vm1353, %v1437, %v1413
    %v1439 = vsel %vm1352, %v99, %v1436
    %v1440 = vsel %vm1352, 0, %v1438
    %v1441 = vcosq.f32.pop %v1439
    %v1442 = vsinq.f32.pop %v1439
    %vm1443 = vweird.f32 %v99
    %v1444 = vadd.s32 %v1440, 3
    %v1445 = vand.u32 %v1444, 3
    %vm1446 = vcmp.lt.s32.totalorder %v1445, 2
    %vm1447 = vcmp.eq.s32.totalorder %v1445, 0
    %v1448 = vxor.u32 %v1442, 2147483648
    %v1449 = vsel %vm1447, %v1441, %v1448
    %vm1450 = vcmp.eq.s32.totalorder %v1445, 2
    %v1451 = vxor.u32 %v1441, 2147483648
    %v1452 = vsel %vm1450, %v1451, %v1442
    %v1453 = vsel %vm1446, %v1449, %v1452
    %v1454 = vsel %vm1443, nan, %v1453
    %v1455 = vand.u32 2147483647, %v100
    %vm1456 = vcmp.le.f32.partialorder %v1455, 0.7853982
    %vm1457 = vcmp.lt.s32.totalorder %v100, 0
    %v1458 = vand.u32 %v100, 2139095040
    %v1459 = vshrl.u32 %v1458, 23
    %v1460 = vsub.s32 %v1459, 127
    %v1461 = vand.u32 2147483647, %v100
    %v1462 = vand.u32 %v1461, 8388607
    %v1463 = vor.u32 %v1462, 8388608
    %v1464 = vsub.s32 0, %v1463
    %v1465 = vadd.s32 %v1460, 1
    %vm1466 = vcmp.gt.s32.totalorder %v1465, 0
    %v1467 = vsel %vm1466, %v1465, 0
    %v1468 = vshrl.u32 %v1467, 5
    %v1469 = vand.u32 %v1467, 31
    %v1470 = vsub.s32 32, %v1469
    %v1471 = vshrl.u32 683565275, %v1470
    %v1472 = vshll.u32 683565275, %v1469
    %v1473 = vshrl.u32 2475754826, %v1470
    %v1474 = vor.u32 %v1472, %v1473
    %v1475 = vshll.u32 2475754826, %v1469
    %v1476 = vshrl.u32 2131351028, %v1470
    %v1477 = vor.u32 %v1475, %v1476
    %v1478 = vshll.u32 2131351028, %v1469
    %v1479 = vshrl.u32 2102212464, %v1470
    %v1480 = vor.u32 %v1478, %v1479
    %v1481 = vshll.u32 2102212464, %v1469
    %v1482 = vshrl.u32 920167782, %v1470
    %v1483 = vor.u32 %v1481, %v1482
    %v1484 = vshll.u32 920167782, %v1469
    %v1485 = vshrl.u32 1326507024, %v1470
    %v1486 = vor.u32 %v1484, %v1485
    %vm1487 = vcmp.lt.s32.totalorder %v1468, 1
    %vm1488 = vcmp.lt.s32.totalorder %v1468, 2
    %vm1489 = vcmp.lt.s32.totalorder %v1468, 3
    %vm1490 = vcmp.lt.s32.totalorder %v1468, 4
    %v1491 = vsel %vm1487, %v1471, %v1474
    %v1492 = vsel %vm1490, %v1480, 2102212464
    %v1493 = vsel %vm1489, %v1477, %v1492
    %v1494 = vsel %vm1488, %v1491, %v1493
    %v1495 = vsel %vm1487, %v1474, %v1477
    %v1496 = vsel %vm1490, %v1483, 920167782
    %v1497 = vsel %vm1489, %v1480, %v1496
    %v1498 = vsel %vm1488, %v1495, %v1497
    %v1499 = vsel %vm1487, %v1477, %v1480
    %v1500 = vsel %vm1490, %v1486, 1326507024
    %v1501 = vsel %vm1489, %v1483, %v1500
    %v1502 = vsel %vm1488, %v1499, %v1501
    %v1503 = vshll.u32 %v1463, 8
    %v1504 = vmul.u32.u64.compose %v1503, %v1502
    %v1505 = vextract.low.u32 %v1504
    %v1506 = vextract.high.u32 %v1504
    %v1507 = vmul.u32.u64.compose %v1503, %v1498
    %v1508 = vextract.low.u32 %v1507
    %v1509 = vextract.high.u32 %v1507
    %v1510 = vmul.u32 %v1503, %v1494
    %v1511 = vadd.s32 %v1506, %v1508
    %vm1512 = vc.u32 %v1506, %v1508
    %v1513 = vadd.s32 %v1509, 1
    %v1514 = vsel %vm1512, %v1513, %v1509
    %v1515 = vadd.s32 %v1510, %v1514
    %v1516 = vadd.s32 %v1515, 536870912
    %v1517 = vshrl.u32 %v1516, 30
    %v1518 = vshll.u32 %v1517, 30
    %v1519 = vsub.s32 %v1515, %v1518
    %vm1520 = vcmp.lt.s32.totalorder %v1519, 0
    %v1521 = vsub.s32 0, %v1519
    %v1522 = vsel %vm1520, %v1521, %v1519
    %v1523 = vclz %v1522
    %v1524 = vsub.s32 %v1523, 2
    %vm1525 = vcmp.gt.s32.totalorder 0, %v1524
    %v1526 = vsel %vm1525, 0, %v1524
    %v1527 = vsub.s32 32, %v1526
    %v1528 = vshll.u32 %v1519, %v1526
    %v1529 = vshrl.u32 %v1511, %v1527
    %v1530 = vor.u32 %v1528, %v1529
    %v1531 = vsub.s32 4294967266, %v1526
    %v1532 = vadd.s32 %v1531, 127
    %v1533 = vshll.u32 %v1532, 23
    %v1534 = vor.u32 4788187, %v1533
    %v1535 = vand.u32 2147483647, %v1534
    %v1537 = vcvt.s32.f32 %v1530
    %v1538 = vmul.f32 %v1537, %v1535
    %v1539 = vxor.u32 %v1538, 2147483648
    %v1540 = vsel %vm1457, %v1539, %v1538
    %v1541 = vsub.s32 4, %v1517
    %v1542 = vsel %vm1457, %v1541, %v1517
    %v1543 = vsel %vm1456, %v100, %v1540
    %v1544 = vsel %vm1456, 0, %v1542
    %v1545 = vcosq.f32.pop %v1543
    %v1546 = vsinq.f32.pop %v1543
    %vm1547 = vweird.f32 %v100
    %v1548 = vadd.s32 %v1544, 3
    %v1549 = vand.u32 %v1548, 3
    %vm1550 = vcmp.lt.s32.totalorder %v1549, 2
    %vm1551 = vcmp.eq.s32.totalorder %v1549, 0
    %v1552 = vxor.u32 %v1546, 2147483648
    %v1553 = vsel %vm1551, %v1545, %v1552
    %vm1554 = vcmp.eq.s32.totalorder %v1549, 2
    %v1555 = vxor.u32 %v1545, 2147483648
    %v1556 = vsel %vm1554, %v1555, %v1546
    %v1557 = vsel %vm1550, %v1553, %v1556
    %v1558 = vsel %vm1547, nan, %v1557
    %v1559 = vand.u32 2147483647, %v101
    %vm1560 = vcmp.le.f32.partialorder %v1559, 0.7853982
    %vm1561 = vcmp.lt.s32.totalorder %v101, 0
    %v1562 = vand.u32 %v101, 2139095040
    %v1563 = vshrl.u32 %v1562, 23
    %v1564 = vsub.s32 %v1563, 127
    %v1565 = vand.u32 2147483647, %v101
    %v1566 = vand.u32 %v1565, 8388607
    %v1567 = vor.u32 %v1566, 8388608
    %v1568 = vsub.s32 0, %v1567
    %v1569 = vadd.s32 %v1564, 1
    %vm1570 = vcmp.gt.s32.totalorder %v1569, 0
    %v1571 = vsel %vm1570, %v1569, 0
    %v1572 = vshrl.u32 %v1571, 5
    %v1573 = vand.u32 %v1571, 31
    %v1574 = vsub.s32 32, %v1573
    %v1575 = vshrl.u32 683565275, %v1574
    %v1576 = vshll.u32 683565275, %v1573
    %v1577 = vshrl.u32 2475754826, %v1574
    %v1578 = vor.u32 %v1576, %v1577
    %v1579 = vshll.u32 2475754826, %v1573
    %v1580 = vshrl.u32 2131351028, %v1574
    %v1581 = vor.u32 %v1579, %v1580
    %v1582 = vshll.u32 2131351028, %v1573
    %v1583 = vshrl.u32 2102212464, %v1574
    %v1584 = vor.u32 %v1582, %v1583
    %v1585 = vshll.u32 2102212464, %v1573
    %v1586 = vshrl.u32 920167782, %v1574
    %v1587 = vor.u32 %v1585, %v1586
    %v1588 = vshll.u32 920167782, %v1573
    %v1589 = vshrl.u32 1326507024, %v1574
    %v1590 = vor.u32 %v1588, %v1589
    %vm1591 = vcmp.lt.s32.totalorder %v1572, 1
    %vm1592 = vcmp.lt.s32.totalorder %v1572, 2
    %vm1593 = vcmp.lt.s32.totalorder %v1572, 3
    %vm1594 = vcmp.lt.s32.totalorder %v1572, 4
    %v1595 = vsel %vm1591, %v1575, %v1578
    %v1596 = vsel %vm1594, %v1584, 2102212464
    %v1597 = vsel %vm1593, %v1581, %v1596
    %v1598 = vsel %vm1592, %v1595, %v1597
    %v1599 = vsel %vm1591, %v1578, %v1581
    %v1600 = vsel %vm1594, %v1587, 920167782
    %v1601 = vsel %vm1593, %v1584, %v1600
    %v1602 = vsel %vm1592, %v1599, %v1601
    %v1603 = vsel %vm1591, %v1581, %v1584
    %v1604 = vsel %vm1594, %v1590, 1326507024
    %v1605 = vsel %vm1593, %v1587, %v1604
    %v1606 = vsel %vm1592, %v1603, %v1605
    %v1607 = vshll.u32 %v1567, 8
    %v1608 = vmul.u32.u64.compose %v1607, %v1606
    %v1609 = vextract.low.u32 %v1608
    %v1610 = vextract.high.u32 %v1608
    %v1611 = vmul.u32.u64.compose %v1607, %v1602
    %v1612 = vextract.low.u32 %v1611
    %v1613 = vextract.high.u32 %v1611
    %v1614 = vmul.u32 %v1607, %v1598
    %v1615 = vadd.s32 %v1610, %v1612
    %vm1616 = vc.u32 %v1610, %v1612
    %v1617 = vadd.s32 %v1613, 1
    %v1618 = vsel %vm1616, %v1617, %v1613
    %v1619 = vadd.s32 %v1614, %v1618
    %v1620 = vadd.s32 %v1619, 536870912
    %v1621 = vshrl.u32 %v1620, 30
    %v1622 = vshll.u32 %v1621, 30
    %v1623 = vsub.s32 %v1619, %v1622
    %vm1624 = vcmp.lt.s32.totalorder %v1623, 0
    %v1625 = vsub.s32 0, %v1623
    %v1626 = vsel %vm1624, %v1625, %v1623
    %v1627 = vclz %v1626
    %v1628 = vsub.s32 %v1627, 2
    %vm1629 = vcmp.gt.s32.totalorder 0, %v1628
    %v1630 = vsel %vm1629, 0, %v1628
    %v1631 = vsub.s32 32, %v1630
    %v1632 = vshll.u32 %v1623, %v1630
    %v1633 = vshrl.u32 %v1615, %v1631
    %v1634 = vor.u32 %v1632, %v1633
    %v1635 = vsub.s32 4294967266, %v1630
    %v1636 = vadd.s32 %v1635, 127
    %v1637 = vshll.u32 %v1636, 23
    %v1638 = vor.u32 4788187, %v1637
    %v1639 = vand.u32 2147483647, %v1638
    %v1641 = vcvt.s32.f32 %v1634
    %v1642 = vmul.f32 %v1641, %v1639
    %v1643 = vxor.u32 %v1642, 2147483648
    %v1644 = vsel %vm1561, %v1643, %v1642
    %v1645 = vsub.s32 4, %v1621
    %v1646 = vsel %vm1561, %v1645, %v1621
    %v1647 = vsel %vm1560, %v101, %v1644
    %v1648 = vsel %vm1560, 0, %v1646
    %v1649 = vcosq.f32.pop %v1647
    %v1650 = vsinq.f32.pop %v1647
    %vm1651 = vweird.f32 %v101
    %v1652 = vadd.s32 %v1648, 3
    %v1653 = vand.u32 %v1652, 3
    %vm1654 = vcmp.lt.s32.totalorder %v1653, 2
    %vm1655 = vcmp.eq.s32.totalorder %v1653, 0
    %v1656 = vxor.u32 %v1650, 2147483648
    %v1657 = vsel %vm1655, %v1649, %v1656
    %vm1658 = vcmp.eq.s32.totalorder %v1653, 2
    %v1659 = vxor.u32 %v1649, 2147483648
    %v1660 = vsel %vm1658, %v1659, %v1650
    %v1661 = vsel %vm1654, %v1657, %v1660
    %v1662 = vsel %vm1651, nan, %v1661
    %v1663 = vand.u32 2147483647, %v102
    %vm1664 = vcmp.le.f32.partialorder %v1663, 0.7853982
    %vm1665 = vcmp.lt.s32.totalorder %v102, 0
    %v1666 = vand.u32 %v102, 2139095040
    %v1667 = vshrl.u32 %v1666, 23
    %v1668 = vsub.s32 %v1667, 127
    %v1669 = vand.u32 2147483647, %v102
    %v1670 = vand.u32 %v1669, 8388607
    %v1671 = vor.u32 %v1670, 8388608
    %v1672 = vsub.s32 0, %v1671
    %v1673 = vadd.s32 %v1668, 1
    %vm1674 = vcmp.gt.s32.totalorder %v1673, 0
    %v1675 = vsel %vm1674, %v1673, 0
    %v1676 = vshrl.u32 %v1675, 5
    %v1677 = vand.u32 %v1675, 31
    %v1678 = vsub.s32 32, %v1677
    %v1679 = vshrl.u32 683565275, %v1678
    %v1680 = vshll.u32 683565275, %v1677
    %v1681 = vshrl.u32 2475754826, %v1678
    %v1682 = vor.u32 %v1680, %v1681
    %v1683 = vshll.u32 2475754826, %v1677
    %v1684 = vshrl.u32 2131351028, %v1678
    %v1685 = vor.u32 %v1683, %v1684
    %v1686 = vshll.u32 2131351028, %v1677
    %v1687 = vshrl.u32 2102212464, %v1678
    %v1688 = vor.u32 %v1686, %v1687
    %v1689 = vshll.u32 2102212464, %v1677
    %v1690 = vshrl.u32 920167782, %v1678
    %v1691 = vor.u32 %v1689, %v1690
    %v1692 = vshll.u32 920167782, %v1677
    %v1693 = vshrl.u32 1326507024, %v1678
    %v1694 = vor.u32 %v1692, %v1693
    %vm1695 = vcmp.lt.s32.totalorder %v1676, 1
    %vm1696 = vcmp.lt.s32.totalorder %v1676, 2
    %vm1697 = vcmp.lt.s32.totalorder %v1676, 3
    %vm1698 = vcmp.lt.s32.totalorder %v1676, 4
    %v1699 = vsel %vm1695, %v1679, %v1682
    %v1700 = vsel %vm1698, %v1688, 2102212464
    %v1701 = vsel %vm1697, %v1685, %v1700
    %v1702 = vsel %vm1696, %v1699, %v1701
    %v1703 = vsel %vm1695, %v1682, %v1685
    %v1704 = vsel %vm1698, %v1691, 920167782
    %v1705 = vsel %vm1697, %v1688, %v1704
    %v1706 = vsel %vm1696, %v1703, %v1705
    %v1707 = vsel %vm1695, %v1685, %v1688
    %v1708 = vsel %vm1698, %v1694, 1326507024
    %v1709 = vsel %vm1697, %v1691, %v1708
    %v1710 = vsel %vm1696, %v1707, %v1709
    %v1711 = vshll.u32 %v1671, 8
    %v1712 = vmul.u32.u64.compose %v1711, %v1710
    %v1713 = vextract.low.u32 %v1712
    %v1714 = vextract.high.u32 %v1712
    %v1715 = vmul.u32.u64.compose %v1711, %v1706
    %v1716 = vextract.low.u32 %v1715
    %v1717 = vextract.high.u32 %v1715
    %v1718 = vmul.u32 %v1711, %v1702
    %v1719 = vadd.s32 %v1714, %v1716
    %vm1720 = vc.u32 %v1714, %v1716
    %v1721 = vadd.s32 %v1717, 1
    %v1722 = vsel %vm1720, %v1721, %v1717
    %v1723 = vadd.s32 %v1718, %v1722
    %v1724 = vadd.s32 %v1723, 536870912
    %v1725 = vshrl.u32 %v1724, 30
    %v1726 = vshll.u32 %v1725, 30
    %v1727 = vsub.s32 %v1723, %v1726
    %vm1728 = vcmp.lt.s32.totalorder %v1727, 0
    %v1729 = vsub.s32 0, %v1727
    %v1730 = vsel %vm1728, %v1729, %v1727
    %v1731 = vclz %v1730
    %v1732 = vsub.s32 %v1731, 2
    %vm1733 = vcmp.gt.s32.totalorder 0, %v1732
    %v1734 = vsel %vm1733, 0, %v1732
    %v1735 = vsub.s32 32, %v1734
    %v1736 = vshll.u32 %v1727, %v1734
    %v1737 = vshrl.u32 %v1719, %v1735
    %v1738 = vor.u32 %v1736, %v1737
    %v1739 = vsub.s32 4294967266, %v1734
    %v1740 = vadd.s32 %v1739, 127
    %v1741 = vshll.u32 %v1740, 23
    %v1742 = vor.u32 4788187, %v1741
    %v1743 = vand.u32 2147483647, %v1742
    %v1745 = vcvt.s32.f32 %v1738
    %v1746 = vmul.f32 %v1745, %v1743
    %v1747 = vxor.u32 %v1746, 2147483648
    %v1748 = vsel %vm1665, %v1747, %v1746
    %v1749 = vsub.s32 4, %v1725
    %v1750 = vsel %vm1665, %v1749, %v1725
    %v1751 = vsel %vm1664, %v102, %v1748
    %v1752 = vsel %vm1664, 0, %v1750
    %v1753 = vcosq.f32.pop %v1751
    %v1754 = vsinq.f32.pop %v1751
    %vm1755 = vweird.f32 %v102
    %v1756 = vadd.s32 %v1752, 3
    %v1757 = vand.u32 %v1756, 3
    %vm1758 = vcmp.lt.s32.totalorder %v1757, 2
    %vm1759 = vcmp.eq.s32.totalorder %v1757, 0
    %v1760 = vxor.u32 %v1754, 2147483648
    %v1761 = vsel %vm1759, %v1753, %v1760
    %vm1762 = vcmp.eq.s32.totalorder %v1757, 2
    %v1763 = vxor.u32 %v1753, 2147483648
    %v1764 = vsel %vm1762, %v1763, %v1754
    %v1765 = vsel %vm1758, %v1761, %v1764
    %v1766 = vsel %vm1755, nan, %v1765
    %1767 = vst [vmem:[#allocation5] sm:$0xff] %v206
    %1768 = vst [vmem:[#allocation5 + $0x8] sm:$0xff] %v310
    %1769 = vst [vmem:[#allocation5 + $0x10] sm:$0xff] %v414
    %1770 = vst [vmem:[#allocation5 + $0x18] sm:$0xff] %v518
    %1771 = vst [vmem:[#allocation5 + $0x20] sm:$0xff] %v622
    %1772 = vst [vmem:[#allocation5 + $0x28] sm:$0xff] %v726
    %1773 = vst [vmem:[#allocation5 + $0x30] sm:$0xff] %v830
    %1774 = vst [vmem:[#allocation5 + $0x38] sm:$0xff] %v934
    %1775 = vst [vmem:[#allocation5 + $0x40] sm:$0xff] %v1038
    %1776 = vst [vmem:[#allocation5 + $0x48] sm:$0xff] %v1142
    %1777 = vst [vmem:[#allocation5 + $0x50] sm:$0xff] %v1246
    %1778 = vst [vmem:[#allocation5 + $0x58] sm:$0xff] %v1350
    %1779 = vst [vmem:[#allocation5 + $0x60] sm:$0xff] %v1454
    %1780 = vst [vmem:[#allocation5 + $0x68] sm:$0xff] %v1558
    %1781 = vst [vmem:[#allocation5 + $0x70] sm:$0xff] %v1662
    %1782 = vst [vmem:[#allocation5 + $0x78] sm:$0xff] %v1766
    // Predicated region
    $region10: #{tpu_custom_call.1} parent=1 // pred_check
      _
    $region11: #{tpu_custom_call.1} parent=1 // pred_check_branch
      %1784 = sbr.rel (0) target = $region13
    $region12: #{tpu_custom_call.1} parent=1 // pred_region
      %s1786 = ssub.s32 2048, 2048
      %1787 = vsyncadd [#allocation4], %s1786
      %s1788 = sshll.u32 [#allocation5], 4
      %s1789 = int_to_ptr.vmem [resolvable:$true] %s1788
      %1794 = dma.vmem_to_hbm [thread:$0]  %s1789, 2048, %s1, [#allocation4], 512, 512, 32
    $region13: #{tpu_custom_call.1} parent=1 // pred_fallthru
      _
    // Predicated region
    $region14: #{tpu_custom_call.1} parent=1 // pred_check
      _
    $region15: #{tpu_custom_call.1} parent=1 // pred_check_branch
      %1796 = sbr.rel (0) target = $region17
    $region16: #{tpu_custom_call.1} parent=1 // pred_region
      %1797 = dma.done [#allocation4], 2048
    $region17: #{tpu_custom_call.1} parent=1 // pred_fallthru
      _
    %1798 = vsyncpa [#allocation3], 1
    %1799 = vsyncpa [#allocation4], 1

</llo_original>
